<compile_context>
chip_gen: v7x
topology: tpu7x:2x2x1
jax: 0.10.0
libtpu: 0.0.40
codegen_flags: <defaults>
</compile_context>

<pallas_src>
import functools
import math

import jax
import jax.numpy as jnp
from jax import lax
from jax.experimental import pallas as pl
from jax.experimental.pallas import tpu as pltpu


def _vmem_capacity_bytes():
    try:
        return int(pltpu.get_tpu_info().vmem_capacity_bytes)
    except Exception:
        return 64 << 20  # conservative fallback (v7x physical VMEM per TC)


def _layernorm(x, gamma, beta, eps, d, approx):
    # torch: alpha * (x - mean) / (std_unbiased + eps) + bias
    mean = jnp.mean(x, axis=-1, keepdims=True)
    diff = x - mean
    var_unbiased = jnp.sum(diff * diff, axis=-1, keepdims=True) * (1.0 / (d - 1))
    std = jnp.sqrt(var_unbiased)
    # approx=True -> EUP vrcp (free bundle slot) on the bf16 performance path;
    # exact reciprocal on the f32 verification path.
    inv = pl.reciprocal(std + eps, approx=approx)
    return gamma * (diff * inv) + beta


def encoder_block_kernel(x_ref,
                         wqkv_ref, bqkv_ref,
                         wo_ref, bo_ref,
                         w1_ref, b1_ref,
                         w2_ref, b2_ref,
                         g1_ref, be1_ref, g2_ref, be2_ref,
                         mask_ref,
                         out_ref,
                         *, eps, compute_dtype, tb, seq, d_model):
    f32 = jnp.float32
    cd = compute_dtype
    approx = cd != f32          # static Python bool
    D = d_model
    M = tb * seq

    x = x_ref[...].reshape(M, D)                      # (TB*S, D) float32

    # ---- residual 0: x + SelfAttention(LN1(x))   (dropout = identity)
    y1 = _layernorm(x, g1_ref[...], be1_ref[...], eps, D, approx).astype(cd)

    # Fused QKV projection (1/sqrt(d_k) already folded into the Q columns).
    qkv = jnp.dot(y1, wqkv_ref[...], preferred_element_type=cd) + bqkv_ref[...]
    q = qkv[:, 0 * D:1 * D].reshape(tb, seq, D)
    k = qkv[:, 1 * D:2 * D].reshape(tb, seq, D)
    v = qkv[:, 2 * D:3 * D].reshape(tb, seq, D)

    # Reference never applies softmax -> attention is linear in v:
    #   per head  out_h = qh @ (kh^T @ vh)
    # All heads at once: k^T @ v is (D, D) per batch row; its block-diagonal
    # (d_k x d_k blocks, selected by the precomputed mask) holds exactly the
    # per-head kh^T @ vh products, so one wide matmul q @ blockdiag(k^T v)
    # reproduces the concatenated head outputs without any (S, S) intermediate.
    # TODO(synk): for d_k >= 128 (many heads / large D) switch to a per-head
    #             batched dot_general to skip the off-diagonal MXU FLOPs.
    kv = lax.dot_general(k, v, (((1,), (1,)), ((0,), (0,))),
                         preferred_element_type=cd)   # (TB, D, D)
    kv = kv * mask_ref[...]                           # static block-diag mask

    attn = lax.dot_general(q, kv, (((2,), (1,)), ((0,), (0,))),
                           preferred_element_type=cd)  # (TB, S, D)
    attn = attn.reshape(M, D)
    # TODO(synk): src_mask masked_fill not implemented (example uses mask=None);
    #             a mask would also invalidate the associativity reordering.
    attn = jnp.dot(attn, wo_ref[...], preferred_element_type=f32) + bo_ref[...]
    x2 = x + attn                                      # f32 residual

    # ---- residual 1: x2 + FFN(LN2(x2))   (dropout = identity)
    y2 = _layernorm(x2, g2_ref[...], be2_ref[...], eps, D, approx).astype(cd)
    h1 = jnp.maximum(
        jnp.dot(y2, w1_ref[...], preferred_element_type=cd) + b1_ref[...], 0.0)
    ff = jnp.dot(h1, w2_ref[...], preferred_element_type=f32) + b2_ref[...]
    out_ref[...] = (x2 + ff).reshape(tb, seq, D)


def prepare_encoder_params(params, *, num_heads, compute_dtype=jnp.bfloat16):
    """Host-side, call ONCE: fuse QKV, fold 1/sqrt(d_k), pre-cast, build mask."""
    (wq, bq, wk, bk, wv, bv, wo, bo, w1, b1, w2, b2, g1, be1, g2, be2) = params
    f32 = jnp.float32
    cd = compute_dtype
    D = wq.shape[0]
    d_k = D // num_heads
    scale = 1.0 / math.sqrt(d_k)

    wqkv = jnp.concatenate(
        [wq.astype(f32) * scale, wk.astype(f32), wv.astype(f32)], axis=1)
    bqkv = jnp.concatenate(
        [bq.astype(f32) * scale, bk.astype(f32), bv.astype(f32)], axis=1)

    head = jnp.arange(D, dtype=jnp.int32) // d_k
    mask = (head[:, None] == head[None, :]).astype(cd)    # (D, D) block-diag

    return dict(
        wqkv=wqkv.astype(cd), bqkv=bqkv.astype(cd),
        wo=wo.astype(cd), bo=bo.astype(f32),
        w1=w1.astype(cd), b1=b1.astype(cd),
        w2=w2.astype(cd), b2=b2.astype(f32),
        g1=g1.astype(f32), be1=be1.astype(f32),
        g2=g2.astype(f32), be2=be2.astype(f32),
        mask=mask, compute_dtype=cd, num_heads=num_heads, d_k=d_k)


def _choose_batch_tile(B, S, D, DF):
    """Pick TB: target TB*S >= 256 for MXU fill, stay inside VMEM, and keep
    >= 2 grid steps when B allows (so the 'parallel' axis shards across both
    TensorCores on v7x)."""
    divisors = [t for t in range(1, B + 1) if B % t == 0]
    target = max(1, -(-256 // S))                      # ceil(256 / S)
    cand = [t for t in divisors if t >= target]
    tb = min(cand) if cand else max(divisors)

    def act_bytes(t):
        m = t * S
        return (2 * 2 * m * D * 4          # x/out slabs, double-buffered, f32
                + 6 * m * D * 4            # f32 intermediates (upper bound)
                + 2 * m * DF * 4           # FFN hidden
                + 2 * t * D * D * 4)       # kv

    budget = int(0.4 * _vmem_capacity_bytes())
    while tb > 1 and act_bytes(tb) > budget:
        smaller = [t for t in divisors if t < tb]
        tb = max(smaller) if smaller else 1
    if B >= 2 and B // tb < 2:
        smaller = [t for t in divisors if B // t >= 2]
        if smaller:
            tb = max(smaller)
    return tb


def encoder_block(x, prepped, *, eps=1e-6, batch_tile=None):
    B, S, D = x.shape
    f32 = jnp.float32
    cd = prepped["compute_dtype"]
    DF = prepped["w1"].shape[1]
    x = x.astype(f32)

    tb = batch_tile if batch_tile is not None else _choose_batch_tile(B, S, D, DF)
    assert B % tb == 0, f"batch_tile {tb} must divide B={B}"
    grid = (B // tb,)
    M = tb * S

    def const_spec(shape):
        # Grid-invariant operand: resident once, no double buffering.
        return pl.BlockSpec(shape, lambda b: (0, 0),
                            pipeline_mode=pl.Buffered(1))

    kernel = functools.partial(encoder_block_kernel, eps=eps, compute_dtype=cd,
                               tb=tb, seq=S, d_model=D)

    # Scoped-VMEM budget from what is actually resident, capped at ~85% of the
    # physical per-core VMEM (v5e/v6e: 128 MiB, v7x: 64 MiB).
    wsize = jnp.dtype(cd).itemsize
    weight_bytes = (5 * D * D + 2 * D * DF) * wsize        # wqkv, wo, w1, w2, mask
    small_bytes = (4 * D + DF) * wsize + 6 * D * 4         # biases + LN params
    act_bytes = 2 * 2 * M * D * 4                          # x + out, double-buffered
    scratch_bytes = (6 * M * D + M * DF) * 4 \
        + (2 * tb * D * D + 3 * M * D + M * DF) * wsize    # intermediates
    vmem_needed = weight_bytes + small_bytes + act_bytes + scratch_bytes
    cap = _vmem_capacity_bytes()
    vmem_limit = int(min(max(2 * vmem_needed + (4 << 20), 16 << 20),
                         int(0.85 * cap)))

    # TODO(synk): for long sequences / large d_ff, add S- and DF-tiling grid axes
    # (two-pass: accumulate k^T v, then stream q tiles; pl.when-accumulated FFN).
    return pl.pallas_call(
        kernel,
        out_shape=jax.ShapeDtypeStruct((B, S, D), f32),
        grid_spec=pltpu.PrefetchScalarGridSpec(
            num_scalar_prefetch=0,
            grid=grid,
            in_specs=[
                pl.BlockSpec((tb, S, D), lambda b: (b, 0, 0)),   # x (batch tile)
                const_spec((D, 3 * D)), const_spec((1, 3 * D)),  # wqkv, bqkv
                const_spec((D, D)), const_spec((1, D)),          # wo, bo
                const_spec((D, DF)), const_spec((1, DF)),        # w1, b1
                const_spec((DF, D)), const_spec((1, D)),         # w2, b2
                const_spec((1, D)), const_spec((1, D)),          # LN1 alpha, bias
                const_spec((1, D)), const_spec((1, D)),          # LN2 alpha, bias
                const_spec((D, D)),                              # block-diag head mask
            ],
            out_specs=pl.BlockSpec((tb, S, D), lambda b: (b, 0, 0)),
        ),
        compiler_params=pltpu.CompilerParams(
            dimension_semantics=("parallel",),
            vmem_limit_bytes=vmem_limit),
    )(x, prepped["wqkv"], prepped["bqkv"], prepped["wo"], prepped["bo"],
      prepped["w1"], prepped["b1"], prepped["w2"], prepped["b2"],
      prepped["g1"], prepped["be1"], prepped["g2"], prepped["be2"],
      prepped["mask"])


def ref_forward(x, params, num_heads, eps=1e-6):
    """Pure-JAX reference mirroring the PyTorch code (for verification)."""
    (wq, bq, wk, bk, wv, bv, wo, bo, w1, b1, w2, b2, g1, be1, g2, be2) = params
    B, S, D = x.shape
    d_k = D // num_heads

    def ln(t, g, b):
        mean = t.mean(-1, keepdims=True)
        diff = t - mean
        std = jnp.sqrt((diff * diff).sum(-1, keepdims=True) / (D - 1))
        return g * diff / (std + eps) + b

    y1 = ln(x, g1, be1)
    q = y1 @ wq + bq
    k = y1 @ wk + bk
    v = y1 @ wv + bv
    q = q.reshape(B, S, num_heads, d_k).transpose(0, 2, 1, 3)
    k = k.reshape(B, S, num_heads, d_k).transpose(0, 2, 1, 3)
    v = v.reshape(B, S, num_heads, d_k).transpose(0, 2, 1, 3)
    scores = (q @ k.transpose(0, 1, 3, 2)) / math.sqrt(d_k)   # no softmax (ref bug)
    attn = scores @ v
    attn = attn.transpose(0, 2, 1, 3).reshape(B, S, D)
    x2 = x + attn @ wo + bo
    y2 = ln(x2, g2, be2)
    h1 = jax.nn.relu(y2 @ w1 + b1)
    return x2 + h1 @ w2 + b2


if __name__ == "__main__":
    B, S, D, H, DF = 2, 16, 128, 4, 512   # lane-dense D (multiple of 128)
    key = jax.random.PRNGKey(0)
    keys = jax.random.split(key, 16)

    def lin(kw, kb, fan_in, fan_out):
        bound = 1.0 / math.sqrt(fan_in)
        w = jax.random.uniform(kw, (fan_in, fan_out), jnp.float32, -bound, bound)
        b = jax.random.uniform(kb, (1, fan_out), jnp.float32, -bound, bound)
        return w, b

    wq, bq = lin(keys[0], keys[1], D, D)
    wk, bk = lin(keys[2], keys[3], D, D)
    wv, bv = lin(keys[4], keys[5], D, D)
    wo, bo = lin(keys[6], keys[7], D, D)
    w1, b1 = lin(keys[8], keys[9], D, DF)
    w2, b2 = lin(keys[10], keys[11], DF, D)
    g1 = jnp.ones((1, D), jnp.float32)
    be1 = jnp.zeros((1, D), jnp.float32)
    g2 = jnp.ones((1, D), jnp.float32)
    be2 = jnp.zeros((1, D), jnp.float32)
    params = (wq, bq, wk, bk, wv, bv, wo, bo, w1, b1, w2, b2, g1, be1, g2, be2)

    x = jax.random.normal(keys[12], (B, S, D), jnp.float32)
    ref = ref_forward(x, params, H)

    # 1) f32 matmul path, default batch tile (TB=1, grid=2): tight check that the
    #    kernel math (fused QKV, folded scaling, K^T V reordering, block-diag
    #    masking) is exact.
    pp_f32 = prepare_encoder_params(params, num_heads=H, compute_dtype=jnp.float32)
    out_f32 = jax.block_until_ready(encoder_block(x, pp_f32))
    err_f32 = float(jnp.max(jnp.abs(out_f32 - ref)))
    assert jnp.allclose(out_f32, ref, rtol=1e-3, atol=1e-3), \
        f"f32 path max abs err {err_f32}"

    # 2) f32 path with TB=2 (single grid step): exercises the multi-row batched
    #    dot_general path.
    out_f32_tb2 = jax.block_until_ready(encoder_block(x, pp_f32, batch_tile=2))
    err_tb2 = float(jnp.max(jnp.abs(out_f32_tb2 - ref)))
    assert jnp.allclose(out_f32_tb2, ref, rtol=1e-3, atol=1e-3), \
        f"f32 TB=2 path max abs err {err_tb2}"

    # 3) bf16 matmul path (the performance configuration): bf16 operands with
    #    f32 accumulation; looser tolerance vs the f32 reference.
    pp_bf16 = prepare_encoder_params(params, num_heads=H, compute_dtype=jnp.bfloat16)
    out_bf16 = jax.block_until_ready(encoder_block(x, pp_bf16))
    err_bf16 = float(jnp.max(jnp.abs(out_bf16 - ref)))
    assert jnp.allclose(out_bf16, ref, rtol=5e-2, atol=5e-2), \
        f"bf16 path max abs err {err_bf16}"

    print("KERNEL_OK")
</pallas_src>

<mosaic_0001>
module attributes {stable_mosaic.version = 11 : i64} {
  func.func @encoder_block_kernel(%arg0: i32, %arg1: memref<1x16x128xf32, #tpu.memory_space<vmem>>, %arg2: memref<128x384xf32, #tpu.memory_space<vmem>>, %arg3: memref<1x384xf32, #tpu.memory_space<vmem>>, %arg4: memref<128x128xf32, #tpu.memory_space<vmem>>, %arg5: memref<1x128xf32, #tpu.memory_space<vmem>>, %arg6: memref<128x512xf32, #tpu.memory_space<vmem>>, %arg7: memref<1x512xf32, #tpu.memory_space<vmem>>, %arg8: memref<512x128xf32, #tpu.memory_space<vmem>>, %arg9: memref<1x128xf32, #tpu.memory_space<vmem>>, %arg10: memref<1x128xf32, #tpu.memory_space<vmem>>, %arg11: memref<1x128xf32, #tpu.memory_space<vmem>>, %arg12: memref<1x128xf32, #tpu.memory_space<vmem>>, %arg13: memref<1x128xf32, #tpu.memory_space<vmem>>, %arg14: memref<128x128xf32, #tpu.memory_space<vmem>>, %arg15: memref<1x16x128xf32, #tpu.memory_space<vmem>>) attributes {dimension_semantics = [#tpu.dimension_semantics<parallel>], iteration_bounds = array<i64: 2>, scalar_prefetch = 0 : i64, scratch_operands = 0 : i64, tpu.core_type = #tpu.core_type<tc>, window_params = [{transform_indices = @transform_0, window_bounds = array<i64: 1, 16, 128>}, {pipeline_mode = #tpu.pipeline_mode<synchronous>, transform_indices = @transform_1, window_bounds = array<i64: 128, 384>}, {pipeline_mode = #tpu.pipeline_mode<synchronous>, transform_indices = @transform_2, window_bounds = array<i64: 1, 384>}, {pipeline_mode = #tpu.pipeline_mode<synchronous>, transform_indices = @transform_3, window_bounds = array<i64: 128, 128>}, {pipeline_mode = #tpu.pipeline_mode<synchronous>, transform_indices = @transform_4, window_bounds = array<i64: 1, 128>}, {pipeline_mode = #tpu.pipeline_mode<synchronous>, transform_indices = @transform_5, window_bounds = array<i64: 128, 512>}, {pipeline_mode = #tpu.pipeline_mode<synchronous>, transform_indices = @transform_6, window_bounds = array<i64: 1, 512>}, {pipeline_mode = #tpu.pipeline_mode<synchronous>, transform_indices = @transform_7, window_bounds = array<i64: 512, 128>}, {pipeline_mode = #tpu.pipeline_mode<synchronous>, transform_indices = @transform_8, window_bounds = array<i64: 1, 128>}, {pipeline_mode = #tpu.pipeline_mode<synchronous>, transform_indices = @transform_9, window_bounds = array<i64: 1, 128>}, {pipeline_mode = #tpu.pipeline_mode<synchronous>, transform_indices = @transform_10, window_bounds = array<i64: 1, 128>}, {pipeline_mode = #tpu.pipeline_mode<synchronous>, transform_indices = @transform_11, window_bounds = array<i64: 1, 128>}, {pipeline_mode = #tpu.pipeline_mode<synchronous>, transform_indices = @transform_12, window_bounds = array<i64: 1, 128>}, {pipeline_mode = #tpu.pipeline_mode<synchronous>, transform_indices = @transform_13, window_bounds = array<i64: 128, 128>}, {transform_indices = @transform_14, window_bounds = array<i64: 1, 16, 128>}]} {
    %c0 = arith.constant 0 : index
    %c0_0 = arith.constant 0 : index
    %c0_1 = arith.constant 0 : index
    %0 = vector.load %arg1[%c0, %c0_0, %c0_1] : memref<1x16x128xf32, #tpu.memory_space<vmem>>, vector<1x16x128xf32>
    %1 = vector.shape_cast %0 : vector<1x16x128xf32> to vector<16x128xf32>
    %c0_2 = arith.constant 0 : index
    %c0_3 = arith.constant 0 : index
    %2 = vector.load %arg10[%c0_2, %c0_3] : memref<1x128xf32, #tpu.memory_space<vmem>>, vector<1x128xf32>
    %c0_4 = arith.constant 0 : index
    %c0_5 = arith.constant 0 : index
    %3 = vector.load %arg11[%c0_4, %c0_5] : memref<1x128xf32, #tpu.memory_space<vmem>>, vector<1x128xf32>
    %cst = arith.constant dense<0.000000e+00> : vector<16xf32>
    %4 = vector.multi_reduction <add>, %1, %cst [1] : vector<16x128xf32> to vector<16xf32>
    %5 = vector.shape_cast %4 : vector<16xf32> to vector<16x1xf32>
    %cst_6 = arith.constant 1.280000e+02 : f32
    %6 = vector.broadcast %cst_6 : f32 to vector<16x1xf32>
    %7 = arith.divf %5, %6 : vector<16x1xf32>
    %8 = vector.broadcast %7 : vector<16x1xf32> to vector<16x128xf32>
    %9 = arith.subf %1, %8 : vector<16x128xf32>
    %10 = arith.mulf %9, %9 : vector<16x128xf32>
    %cst_7 = arith.constant dense<0.000000e+00> : vector<16xf32>
    %11 = vector.multi_reduction <add>, %10, %cst_7 [1] : vector<16x128xf32> to vector<16xf32>
    %12 = vector.shape_cast %11 : vector<16xf32> to vector<16x1xf32>
    %cst_8 = arith.constant 0.00787401571 : f32
    %13 = vector.broadcast %cst_8 : f32 to vector<16x1xf32>
    %14 = arith.mulf %12, %13 : vector<16x1xf32>
    %15 = math.sqrt %14 : vector<16x1xf32>
    %cst_9 = arith.constant 9.99999997E-7 : f32
    %16 = vector.broadcast %cst_9 : f32 to vector<16x1xf32>
    %17 = arith.addf %15, %16 : vector<16x1xf32>
    %18 = tpu.reciprocal %17 : vector<16x1xf32> -> vector<16x1xf32>
    %19 = vector.broadcast %18 : vector<16x1xf32> to vector<16x128xf32>
    %20 = arith.mulf %9, %19 : vector<16x128xf32>
    %21 = vector.broadcast %2 : vector<1x128xf32> to vector<16x128xf32>
    %22 = arith.mulf %21, %20 : vector<16x128xf32>
    %23 = vector.broadcast %3 : vector<1x128xf32> to vector<16x128xf32>
    %24 = arith.addf %22, %23 : vector<16x128xf32>
    %c0_10 = arith.constant 0 : index
    %c0_11 = arith.constant 0 : index
    %25 = vector.load %arg2[%c0_10, %c0_11] : memref<128x384xf32, #tpu.memory_space<vmem>>, vector<128x384xf32>
    %cst_12 = arith.constant dense<0.000000e+00> : vector<16x384xf32>
    %26 = tpu.matmul %24, %25, %cst_12 {dimension_numbers = #tpu.dot_dimension_numbers<[1], [0], [0], [1], [0, 0, 1, 1], [], []>} : vector<16x128xf32>, vector<128x384xf32>, vector<16x384xf32> -> vector<16x384xf32>
    %c0_13 = arith.constant 0 : index
    %c0_14 = arith.constant 0 : index
    %27 = vector.load %arg3[%c0_13, %c0_14] : memref<1x384xf32, #tpu.memory_space<vmem>>, vector<1x384xf32>
    %28 = vector.broadcast %27 : vector<1x384xf32> to vector<16x384xf32>
    %29 = arith.addf %26, %28 : vector<16x384xf32>
    %30 = vector.extract_strided_slice %29 {offsets = [0, 0], sizes = [16, 128], strides = [1, 1]} : vector<16x384xf32> to vector<16x128xf32>
    %31 = vector.shape_cast %30 : vector<16x128xf32> to vector<1x16x128xf32>
    %32 = vector.extract_strided_slice %29 {offsets = [0, 128], sizes = [16, 128], strides = [1, 1]} : vector<16x384xf32> to vector<16x128xf32>
    %33 = vector.shape_cast %32 : vector<16x128xf32> to vector<1x16x128xf32>
    %34 = vector.extract_strided_slice %29 {offsets = [0, 256], sizes = [16, 128], strides = [1, 1]} : vector<16x384xf32> to vector<16x128xf32>
    %35 = vector.shape_cast %34 : vector<16x128xf32> to vector<1x16x128xf32>
    %cst_15 = arith.constant dense<0.000000e+00> : vector<1x128x128xf32>
    %36 = tpu.matmul %33, %35, %cst_15 {dimension_numbers = #tpu.dot_dimension_numbers<[1], [1], [2], [2], [0, 0, 0, 2, 1, 2], [0], [0]>} : vector<1x16x128xf32>, vector<1x16x128xf32>, vector<1x128x128xf32> -> vector<1x128x128xf32>
    %c0_16 = arith.constant 0 : index
    %c0_17 = arith.constant 0 : index
    %37 = vector.load %arg14[%c0_16, %c0_17] : memref<128x128xf32, #tpu.memory_space<vmem>>, vector<128x128xf32>
    %38 = vector.shape_cast %37 : vector<128x128xf32> to vector<1x128x128xf32>
    %39 = arith.mulf %36, %38 : vector<1x128x128xf32>
    %cst_18 = arith.constant dense<0.000000e+00> : vector<1x16x128xf32>
    %40 = tpu.matmul %31, %39, %cst_18 {dimension_numbers = #tpu.dot_dimension_numbers<[2], [1], [1], [2], [0, 0, 0, 1, 1, 2], [0], [0]>} : vector<1x16x128xf32>, vector<1x128x128xf32>, vector<1x16x128xf32> -> vector<1x16x128xf32>
    %41 = vector.shape_cast %40 : vector<1x16x128xf32> to vector<16x128xf32>
    %c0_19 = arith.constant 0 : index
    %c0_20 = arith.constant 0 : index
    %42 = vector.load %arg4[%c0_19, %c0_20] : memref<128x128xf32, #tpu.memory_space<vmem>>, vector<128x128xf32>
    %cst_21 = arith.constant dense<0.000000e+00> : vector<16x128xf32>
    %43 = tpu.matmul %41, %42, %cst_21 {dimension_numbers = #tpu.dot_dimension_numbers<[1], [0], [0], [1], [0, 0, 1, 1], [], []>} : vector<16x128xf32>, vector<128x128xf32>, vector<16x128xf32> -> vector<16x128xf32>
    %c0_22 = arith.constant 0 : index
    %c0_23 = arith.constant 0 : index
    %44 = vector.load %arg5[%c0_22, %c0_23] : memref<1x128xf32, #tpu.memory_space<vmem>>, vector<1x128xf32>
    %45 = vector.broadcast %44 : vector<1x128xf32> to vector<16x128xf32>
    %46 = arith.addf %43, %45 : vector<16x128xf32>
    %47 = arith.addf %1, %46 : vector<16x128xf32>
    %c0_24 = arith.constant 0 : index
    %c0_25 = arith.constant 0 : index
    %48 = vector.load %arg12[%c0_24, %c0_25] : memref<1x128xf32, #tpu.memory_space<vmem>>, vector<1x128xf32>
    %c0_26 = arith.constant 0 : index
    %c0_27 = arith.constant 0 : index
    %49 = vector.load %arg13[%c0_26, %c0_27] : memref<1x128xf32, #tpu.memory_space<vmem>>, vector<1x128xf32>
    %cst_28 = arith.constant dense<0.000000e+00> : vector<16xf32>
    %50 = vector.multi_reduction <add>, %47, %cst_28 [1] : vector<16x128xf32> to vector<16xf32>
    %51 = vector.shape_cast %50 : vector<16xf32> to vector<16x1xf32>
    %cst_29 = arith.constant 1.280000e+02 : f32
    %52 = vector.broadcast %cst_29 : f32 to vector<16x1xf32>
    %53 = arith.divf %51, %52 : vector<16x1xf32>
    %54 = vector.broadcast %53 : vector<16x1xf32> to vector<16x128xf32>
    %55 = arith.subf %47, %54 : vector<16x128xf32>
    %56 = arith.mulf %55, %55 : vector<16x128xf32>
    %cst_30 = arith.constant dense<0.000000e+00> : vector<16xf32>
    %57 = vector.multi_reduction <add>, %56, %cst_30 [1] : vector<16x128xf32> to vector<16xf32>
    %58 = vector.shape_cast %57 : vector<16xf32> to vector<16x1xf32>
    %cst_31 = arith.constant 0.00787401571 : f32
    %59 = vector.broadcast %cst_31 : f32 to vector<16x1xf32>
    %60 = arith.mulf %58, %59 : vector<16x1xf32>
    %61 = math.sqrt %60 : vector<16x1xf32>
    %cst_32 = arith.constant 9.99999997E-7 : f32
    %62 = vector.broadcast %cst_32 : f32 to vector<16x1xf32>
    %63 = arith.addf %61, %62 : vector<16x1xf32>
    %64 = tpu.reciprocal %63 : vector<16x1xf32> -> vector<16x1xf32>
    %65 = vector.broadcast %64 : vector<16x1xf32> to vector<16x128xf32>
    %66 = arith.mulf %55, %65 : vector<16x128xf32>
    %67 = vector.broadcast %48 : vector<1x128xf32> to vector<16x128xf32>
    %68 = arith.mulf %67, %66 : vector<16x128xf32>
    %69 = vector.broadcast %49 : vector<1x128xf32> to vector<16x128xf32>
    %70 = arith.addf %68, %69 : vector<16x128xf32>
    %c0_33 = arith.constant 0 : index
    %c0_34 = arith.constant 0 : index
    %71 = vector.load %arg6[%c0_33, %c0_34] : memref<128x512xf32, #tpu.memory_space<vmem>>, vector<128x512xf32>
    %cst_35 = arith.constant dense<0.000000e+00> : vector<16x512xf32>
    %72 = tpu.matmul %70, %71, %cst_35 {dimension_numbers = #tpu.dot_dimension_numbers<[1], [0], [0], [1], [0, 0, 1, 1], [], []>} : vector<16x128xf32>, vector<128x512xf32>, vector<16x512xf32> -> vector<16x512xf32>
    %c0_36 = arith.constant 0 : index
    %c0_37 = arith.constant 0 : index
    %73 = vector.load %arg7[%c0_36, %c0_37] : memref<1x512xf32, #tpu.memory_space<vmem>>, vector<1x512xf32>
    %74 = vector.broadcast %73 : vector<1x512xf32> to vector<16x512xf32>
    %75 = arith.addf %72, %74 : vector<16x512xf32>
    %cst_38 = arith.constant 0.000000e+00 : f32
    %76 = vector.broadcast %cst_38 : f32 to vector<16x512xf32>
    %77 = arith.maximumf %75, %76 : vector<16x512xf32>
    %c0_39 = arith.constant 0 : index
    %c0_40 = arith.constant 0 : index
    %78 = vector.load %arg8[%c0_39, %c0_40] : memref<512x128xf32, #tpu.memory_space<vmem>>, vector<512x128xf32>
    %cst_41 = arith.constant dense<0.000000e+00> : vector<16x128xf32>
    %79 = tpu.matmul %77, %78, %cst_41 {dimension_numbers = #tpu.dot_dimension_numbers<[1], [0], [0], [1], [0, 0, 1, 1], [], []>} : vector<16x512xf32>, vector<512x128xf32>, vector<16x128xf32> -> vector<16x128xf32>
    %c0_42 = arith.constant 0 : index
    %c0_43 = arith.constant 0 : index
    %80 = vector.load %arg9[%c0_42, %c0_43] : memref<1x128xf32, #tpu.memory_space<vmem>>, vector<1x128xf32>
    %81 = vector.broadcast %80 : vector<1x128xf32> to vector<16x128xf32>
    %82 = arith.addf %79, %81 : vector<16x128xf32>
    %83 = arith.addf %47, %82 : vector<16x128xf32>
    %84 = vector.shape_cast %83 : vector<16x128xf32> to vector<1x16x128xf32>
    %c0_44 = arith.constant 0 : index
    %c0_45 = arith.constant 0 : index
    %c0_46 = arith.constant 0 : index
    %85 = vector.load %arg15[%c0_44, %c0_45, %c0_46] : memref<1x16x128xf32, #tpu.memory_space<vmem>>, vector<1x16x128xf32>
    tpu.vector_store %arg15[%c0_44, %c0_45, %c0_46], %84 {strides = array<i32>} : memref<1x16x128xf32, #tpu.memory_space<vmem>>, vector<1x16x128xf32>,
    return
  }
  func.func @transform_0(%arg0: i32) -> (i32, i32, i32) {
    %c0_i32 = arith.constant 0 : i32
    %c0_i32_0 = arith.constant 0 : i32
    %c0_i32_1 = arith.constant 0 : i32
    return %arg0, %c0_i32, %c0_i32_0 : i32, i32, i32
  }
  func.func @transform_1(%arg0: i32) -> (i32, i32) {
    %c0_i32 = arith.constant 0 : i32
    %c0_i32_0 = arith.constant 0 : i32
    %c0_i32_1 = arith.constant 0 : i32
    return %c0_i32, %c0_i32_0 : i32, i32
  }
  func.func @transform_2(%arg0: i32) -> (i32, i32) {
    %c0_i32 = arith.constant 0 : i32
    %c0_i32_0 = arith.constant 0 : i32
    %c0_i32_1 = arith.constant 0 : i32
    return %c0_i32, %c0_i32_0 : i32, i32
  }
  func.func @transform_3(%arg0: i32) -> (i32, i32) {
    %c0_i32 = arith.constant 0 : i32
    %c0_i32_0 = arith.constant 0 : i32
    %c0_i32_1 = arith.constant 0 : i32
    return %c0_i32, %c0_i32_0 : i32, i32
  }
  func.func @transform_4(%arg0: i32) -> (i32, i32) {
    %c0_i32 = arith.constant 0 : i32
    %c0_i32_0 = arith.constant 0 : i32
    %c0_i32_1 = arith.constant 0 : i32
    return %c0_i32, %c0_i32_0 : i32, i32
  }
  func.func @transform_5(%arg0: i32) -> (i32, i32) {
    %c0_i32 = arith.constant 0 : i32
    %c0_i32_0 = arith.constant 0 : i32
    %c0_i32_1 = arith.constant 0 : i32
    return %c0_i32, %c0_i32_0 : i32, i32
  }
  func.func @transform_6(%arg0: i32) -> (i32, i32) {
    %c0_i32 = arith.constant 0 : i32
    %c0_i32_0 = arith.constant 0 : i32
    %c0_i32_1 = arith.constant 0 : i32
    return %c0_i32, %c0_i32_0 : i32, i32
  }
  func.func @transform_7(%arg0: i32) -> (i32, i32) {
    %c0_i32 = arith.constant 0 : i32
    %c0_i32_0 = arith.constant 0 : i32
    %c0_i32_1 = arith.constant 0 : i32
    return %c0_i32, %c0_i32_0 : i32, i32
  }
  func.func @transform_8(%arg0: i32) -> (i32, i32) {
    %c0_i32 = arith.constant 0 : i32
    %c0_i32_0 = arith.constant 0 : i32
    %c0_i32_1 = arith.constant 0 : i32
    return %c0_i32, %c0_i32_0 : i32, i32
  }
  func.func @transform_9(%arg0: i32) -> (i32, i32) {
    %c0_i32 = arith.constant 0 : i32
    %c0_i32_0 = arith.constant 0 : i32
    %c0_i32_1 = arith.constant 0 : i32
    return %c0_i32, %c0_i32_0 : i32, i32
  }
  func.func @transform_10(%arg0: i32) -> (i32, i32) {
    %c0_i32 = arith.constant 0 : i32
    %c0_i32_0 = arith.constant 0 : i32
    %c0_i32_1 = arith.constant 0 : i32
    return %c0_i32, %c0_i32_0 : i32, i32
  }
  func.func @transform_11(%arg0: i32) -> (i32, i32) {
    %c0_i32 = arith.constant 0 : i32
    %c0_i32_0 = arith.constant 0 : i32
    %c0_i32_1 = arith.constant 0 : i32
    return %c0_i32, %c0_i32_0 : i32, i32
  }
  func.func @transform_12(%arg0: i32) -> (i32, i32) {
    %c0_i32 = arith.constant 0 : i32
    %c0_i32_0 = arith.constant 0 : i32
    %c0_i32_1 = arith.constant 0 : i32
    return %c0_i32, %c0_i32_0 : i32, i32
  }
  func.func @transform_13(%arg0: i32) -> (i32, i32) {
    %c0_i32 = arith.constant 0 : i32
    %c0_i32_0 = arith.constant 0 : i32
    %c0_i32_1 = arith.constant 0 : i32
    return %c0_i32, %c0_i32_0 : i32, i32
  }
  func.func @transform_14(%arg0: i32) -> (i32, i32, i32) {
    %c0_i32 = arith.constant 0 : i32
    %c0_i32_0 = arith.constant 0 : i32
    %c0_i32_1 = arith.constant 0 : i32
    return %arg0, %c0_i32, %c0_i32_0 : i32, i32, i32
  }
}

</mosaic_0001>

<llo_original>
// kernel: tpu_custom_call.1
$region0: #{tpu_custom_call.1}
  #allocation0 [shape = 'u32[]', space=smem, size = 0x4, offset = 0x4, fixed_abs, tag = 'smem constant byte address 0x4 - core index']
  #allocation1 [shape = 'u32[144,128]{1,0:T(1,128)}', space=vmem, size = 0x12000, scoped, tag = 'internal scratch']
  %s0 = inlined_call_operand.hbm [shape: f32[2,16,128], index: 0, kind: input, shape index: {}]
  %s1 = inlined_call_operand.hbm [shape: f32[128,384], index: 1, kind: input, shape index: {}]
  %s2 = inlined_call_operand.vmem [shape: f32[1,384], index: 2, kind: input, shape index: {}]
  %s3 = inlined_call_operand.hbm [shape: f32[128,128], index: 3, kind: input, shape index: {}]
  %s4 = inlined_call_operand.vmem [shape: f32[1,128], index: 4, kind: input, shape index: {}]
  %s5 = inlined_call_operand.hbm [shape: f32[128,512], index: 5, kind: input, shape index: {}]
  %s6 = inlined_call_operand.vmem [shape: f32[1,512], index: 6, kind: input, shape index: {}]
  %s7 = inlined_call_operand.hbm [shape: f32[512,128], index: 7, kind: input, shape index: {}]
  %s8 = inlined_call_operand.vmem [shape: f32[1,128], index: 8, kind: input, shape index: {}]
  %s9 = inlined_call_operand.vmem [shape: f32[1,128], index: 9, kind: input, shape index: {}]
  %s10 = inlined_call_operand.vmem [shape: f32[1,128], index: 10, kind: input, shape index: {}]
  %s11 = inlined_call_operand.vmem [shape: f32[1,128], index: 11, kind: input, shape index: {}]
  %s12 = inlined_call_operand.vmem [shape: f32[1,128], index: 12, kind: input, shape index: {}]
  %s13 = inlined_call_operand.hbm [shape: f32[128,128], index: 13, kind: input, shape index: {}]
  %s14 = inlined_call_operand.hbm [shape: f32[2,16,128], index: 14, kind: output, shape index: {}]
  %s15 = sld [smem:[#allocation0]]
  $region113: #{tpu_custom_call.1} parent=0
    _
  %s17 = ssub.s32 1, %s15
  %s18 = scalar_select 0, %s17, %s15
  $region1: #{tpu_custom_call.1} parent=0
    #allocation2 [shape = 'u8[16384]{0}', space=vmem, size = 0x4000, scoped, tag = 'input window, operand 0']
    #allocation3 [shape = 's32[2]{0}', space=sflag, size = 0x8, scoped, tag = 'scoped memory for tpu_custom_call.1']
    #allocation4 [shape = 's32[2]{0}', space=sflag, size = 0x8, scoped, tag = 'scoped memory for tpu_custom_call.1']
    #allocation5 [shape = 'u8[196608]{0}', space=vmem, size = 0x30000, scoped, tag = 'input window, operand 1, single buffered']
    #allocation6 [shape = 's32[1]{0}', space=sflag, size = 0x4, scoped, tag = 'scoped memory for tpu_custom_call.1']
    #allocation7 [shape = 'u8[65536]{0}', space=vmem, size = 0x10000, scoped, tag = 'input window, operand 3, single buffered']
    #allocation8 [shape = 'u8[262144]{0}', space=vmem, size = 0x40000, scoped, tag = 'input window, operand 5, single buffered']
    #allocation9 [shape = 's32[1]{0}', space=sflag, size = 0x4, scoped, tag = 'scoped memory for tpu_custom_call.1']
    #allocation10 [shape = 'u8[262144]{0}', space=vmem, size = 0x40000, scoped, tag = 'input window, operand 7, single buffered']
    #allocation11 [shape = 'u8[65536]{0}', space=vmem, size = 0x10000, scoped, tag = 'input window, operand 13, single buffered']
    #allocation12 [shape = 's32[1]{0}', space=sflag, size = 0x4, scoped, tag = 'scoped memory for tpu_custom_call.1']
    #allocation13 [shape = 'u8[16384]{0}', space=vmem, size = 0x4000, scoped, tag = 'output window, operand 0']
    %19 = vsyncpa [#allocation3], 0
    %s20 = scalar_lea.sflag [#allocation3], 1
    %21 = vsyncpa %s20, 0
    %22 = vsyncpa [#allocation6], 0
    %23 = vsyncpa [#allocation9], 0
    %24 = vsyncpa [#allocation12], 0
    %25 = vsyncpa [#allocation4], 0
    %s26 = scalar_lea.sflag [#allocation4], 1
    %27 = vsyncpa %s26, 0
    loop: start=0, step=1, limit=4
    $region2: #{tpu_custom_call.1} parent=1 // loop_pre_header
      _
    $region3: #{tpu_custom_call.1} parent=1 // loop_header
      %s29 = sphi 0, %s33
      %p30 = scmp.ge.s32.totalorder %s29, 4
      %s39 = sphi 0, %s41
      %s42 = sphi 0, %s39
      %s43 = sphi 0, %s42
      %s59 = sphi 0, %s43
      %s63 = sphi 0, %s63
      %s65 = sphi 0, %s63
      %s66 = sphi 0, %s65
      %s80 = sphi 0, %s66
      %s84 = sphi 0, %s84
      %s86 = sphi 0, %s84
      %s87 = sphi 0, %s86
      %s101 = sphi 0, %s87
      %s105 = sphi 0, %s105
      %s107 = sphi 0, %s105
      %s108 = sphi 0, %s107
      %s122 = sphi 0, %s108
      %s126 = sphi 0, %s126
      %s128 = sphi 0, %s126
      %s129 = sphi 0, %s128
      %s143 = sphi 0, %s129
      %s147 = sphi 0, %s147
      %s149 = sphi 0, %s147
      %s150 = sphi 0, %s149
      %s164 = sphi 0, %s150
      %s168 = sphi 0, %s168
      %s170 = sphi 0, %s168
      %s171 = sphi 0, %s170
      %s185 = sphi 0, %s171
      %s189 = sphi 0, %s189
      %s191 = sphi 0, %s189
      %s192 = sphi 0, %s191
      %s206 = sphi 0, %s192
      %s210 = sphi 0, %s210
      %s212 = sphi 0, %s210
      %s213 = sphi 0, %s212
      %s227 = sphi 0, %s213
      %s231 = sphi 0, %s231
      %s233 = sphi 0, %s231
      %s234 = sphi 0, %s233
      %s248 = sphi 0, %s234
      %s252 = sphi 0, %s252
      %s254 = sphi 0, %s252
      %s255 = sphi 0, %s254
      %s269 = sphi 0, %s255
      %s273 = sphi 0, %s273
      %s275 = sphi 0, %s273
      %s276 = sphi 0, %s275
      %s290 = sphi 0, %s276
      %s294 = sphi 0, %s294
      %s296 = sphi 0, %s294
      %s297 = sphi 0, %s296
      %s311 = sphi 0, %s297
      %s315 = sphi 0, %s315
      %s317 = sphi 0, %s315
      %s318 = sphi 0, %s317
      %s332 = sphi 0, %s318
      %s338 = sphi 0, %s340
      %s341 = sphi 0, %s338
      %s342 = sphi 0, %s341
      %s358 = sphi 0, %s342
    $region4: #{tpu_custom_call.1} parent=1 // loop_header_branch
      %32 = sbr.rel (%p30) target = $region8
    $region5: #{tpu_custom_call.1} parent=1 // loop_body
      %s34 = ssub.s32 %s29, 1
      %s35 = ssub.s32 %s29, 2
      %s36 = sadd.s32 %s29, 1
      %s37 = ssub.s32 %s29, %s36
      %p38 = scmp.eq.s32.totalorder %s37, 0
      %s40 = sadd.s32 %s39, 1
      %s41 = scalar_select %p38, %s39, %s40
      %p44 = pneg %p38
      %p45 = scmp.eq.s32.totalorder %s29, 1
      %p46 = por %p44, %p45
      %p47 = scmp.ne.s32.totalorder %s39, %s42
      %p48 = scmp.eq.s32.totalorder %s29, 0
      %p49 = por %p47, %p48
      %p50 = scmp.ne.s32.totalorder %s39, %s42
      %p51 = scmp.eq.s32.totalorder %s34, 1
      %p52 = por %p50, %p51
      %p53 = scmp.ne.s32.totalorder %s42, %s43
      %p54 = scmp.eq.s32.totalorder %s34, 0
      %p55 = por %p53, %p54
      %p56 = scmp.ne.s32.totalorder %s42, %s43
      %p57 = scmp.eq.s32.totalorder %s35, 1
      %p58 = por %p56, %p57
      %p60 = scmp.ne.s32.totalorder %s43, %s59
      %p61 = scmp.eq.s32.totalorder %s35, 0
      %p62 = por %p60, %p61
      %s64 = sadd.s32 %s63, 1
      %p67 = scmp.eq.s32.totalorder %s29, 1
      %p68 = scmp.ne.s32.totalorder %s63, %s65
      %p69 = scmp.eq.s32.totalorder %s29, 0
      %p70 = por %p68, %p69
      %p71 = scmp.ne.s32.totalorder %s63, %s65
      %p72 = scmp.eq.s32.totalorder %s34, 1
      %p73 = por %p71, %p72
      %p74 = scmp.ne.s32.totalorder %s65, %s66
      %p75 = scmp.eq.s32.totalorder %s34, 0
      %p76 = por %p74, %p75
      %p77 = scmp.ne.s32.totalorder %s65, %s66
      %p78 = scmp.eq.s32.totalorder %s35, 1
      %p79 = por %p77, %p78
      %p81 = scmp.ne.s32.totalorder %s66, %s80
      %p82 = scmp.eq.s32.totalorder %s35, 0
      %p83 = por %p81, %p82
      %s85 = sadd.s32 %s84, 1
      %p88 = scmp.eq.s32.totalorder %s29, 1
      %p89 = scmp.ne.s32.totalorder %s84, %s86
      %p90 = scmp.eq.s32.totalorder %s29, 0
      %p91 = por %p89, %p90
      %p92 = scmp.ne.s32.totalorder %s84, %s86
      %p93 = scmp.eq.s32.totalorder %s34, 1
      %p94 = por %p92, %p93
      %p95 = scmp.ne.s32.totalorder %s86, %s87
      %p96 = scmp.eq.s32.totalorder %s34, 0
      %p97 = por %p95, %p96
      %p98 = scmp.ne.s32.totalorder %s86, %s87
      %p99 = scmp.eq.s32.totalorder %s35, 1
      %p100 = por %p98, %p99
      %p102 = scmp.ne.s32.totalorder %s87, %s101
      %p103 = scmp.eq.s32.totalorder %s35, 0
      %p104 = por %p102, %p103
      %s106 = sadd.s32 %s105, 1
      %p109 = scmp.eq.s32.totalorder %s29, 1
      %p110 = scmp.ne.s32.totalorder %s105, %s107
      %p111 = scmp.eq.s32.totalorder %s29, 0
      %p112 = por %p110, %p111
      %p113 = scmp.ne.s32.totalorder %s105, %s107
      %p114 = scmp.eq.s32.totalorder %s34, 1
      %p115 = por %p113, %p114
      %p116 = scmp.ne.s32.totalorder %s107, %s108
      %p117 = scmp.eq.s32.totalorder %s34, 0
      %p118 = por %p116, %p117
      %p119 = scmp.ne.s32.totalorder %s107, %s108
      %p120 = scmp.eq.s32.totalorder %s35, 1
      %p121 = por %p119, %p120
      %p123 = scmp.ne.s32.totalorder %s108, %s122
      %p124 = scmp.eq.s32.totalorder %s35, 0
      %p125 = por %p123, %p124
      %s127 = sadd.s32 %s126, 1
      %p130 = scmp.eq.s32.totalorder %s29, 1
      %p131 = scmp.ne.s32.totalorder %s126, %s128
      %p132 = scmp.eq.s32.totalorder %s29, 0
      %p133 = por %p131, %p132
      %p134 = scmp.ne.s32.totalorder %s126, %s128
      %p135 = scmp.eq.s32.totalorder %s34, 1
      %p136 = por %p134, %p135
      %p137 = scmp.ne.s32.totalorder %s128, %s129
      %p138 = scmp.eq.s32.totalorder %s34, 0
      %p139 = por %p137, %p138
      %p140 = scmp.ne.s32.totalorder %s128, %s129
      %p141 = scmp.eq.s32.totalorder %s35, 1
      %p142 = por %p140, %p141
      %p144 = scmp.ne.s32.totalorder %s129, %s143
      %p145 = scmp.eq.s32.totalorder %s35, 0
      %p146 = por %p144, %p145
      %s148 = sadd.s32 %s147, 1
      %p151 = scmp.eq.s32.totalorder %s29, 1
      %p152 = scmp.ne.s32.totalorder %s147, %s149
      %p153 = scmp.eq.s32.totalorder %s29, 0
      %p154 = por %p152, %p153
      %p155 = scmp.ne.s32.totalorder %s147, %s149
      %p156 = scmp.eq.s32.totalorder %s34, 1
      %p157 = por %p155, %p156
      %p158 = scmp.ne.s32.totalorder %s149, %s150
      %p159 = scmp.eq.s32.totalorder %s34, 0
      %p160 = por %p158, %p159
      %p161 = scmp.ne.s32.totalorder %s149, %s150
      %p162 = scmp.eq.s32.totalorder %s35, 1
      %p163 = por %p161, %p162
      %p165 = scmp.ne.s32.totalorder %s150, %s164
      %p166 = scmp.eq.s32.totalorder %s35, 0
      %p167 = por %p165, %p166
      %s169 = sadd.s32 %s168, 1
      %p172 = scmp.eq.s32.totalorder %s29, 1
      %p173 = scmp.ne.s32.totalorder %s168, %s170
      %p174 = scmp.eq.s32.totalorder %s29, 0
      %p175 = por %p173, %p174
      %p176 = scmp.ne.s32.totalorder %s168, %s170
      %p177 = scmp.eq.s32.totalorder %s34, 1
      %p178 = por %p176, %p177
      %p179 = scmp.ne.s32.totalorder %s170, %s171
      %p180 = scmp.eq.s32.totalorder %s34, 0
      %p181 = por %p179, %p180
      %p182 = scmp.ne.s32.totalorder %s170, %s171
      %p183 = scmp.eq.s32.totalorder %s35, 1
      %p184 = por %p182, %p183
      %p186 = scmp.ne.s32.totalorder %s171, %s185
      %p187 = scmp.eq.s32.totalorder %s35, 0
      %p188 = por %p186, %p187
      %s190 = sadd.s32 %s189, 1
      %p193 = scmp.eq.s32.totalorder %s29, 1
      %p194 = scmp.ne.s32.totalorder %s189, %s191
      %p195 = scmp.eq.s32.totalorder %s29, 0
      %p196 = por %p194, %p195
      %p197 = scmp.ne.s32.totalorder %s189, %s191
      %p198 = scmp.eq.s32.totalorder %s34, 1
      %p199 = por %p197, %p198
      %p200 = scmp.ne.s32.totalorder %s191, %s192
      %p201 = scmp.eq.s32.totalorder %s34, 0
      %p202 = por %p200, %p201
      %p203 = scmp.ne.s32.totalorder %s191, %s192
      %p204 = scmp.eq.s32.totalorder %s35, 1
      %p205 = por %p203, %p204
      %p207 = scmp.ne.s32.totalorder %s192, %s206
      %p208 = scmp.eq.s32.totalorder %s35, 0
      %p209 = por %p207, %p208
      %s211 = sadd.s32 %s210, 1
      %p214 = scmp.eq.s32.totalorder %s29, 1
      %p215 = scmp.ne.s32.totalorder %s210, %s212
      %p216 = scmp.eq.s32.totalorder %s29, 0
      %p217 = por %p215, %p216
      %p218 = scmp.ne.s32.totalorder %s210, %s212
      %p219 = scmp.eq.s32.totalorder %s34, 1
      %p220 = por %p218, %p219
      %p221 = scmp.ne.s32.totalorder %s212, %s213
      %p222 = scmp.eq.s32.totalorder %s34, 0
      %p223 = por %p221, %p222
      %p224 = scmp.ne.s32.totalorder %s212, %s213
      %p225 = scmp.eq.s32.totalorder %s35, 1
      %p226 = por %p224, %p225
      %p228 = scmp.ne.s32.totalorder %s213, %s227
      %p229 = scmp.eq.s32.totalorder %s35, 0
      %p230 = por %p228, %p229
      %s232 = sadd.s32 %s231, 1
      %p235 = scmp.eq.s32.totalorder %s29, 1
      %p236 = scmp.ne.s32.totalorder %s231, %s233
      %p237 = scmp.eq.s32.totalorder %s29, 0
      %p238 = por %p236, %p237
      %p239 = scmp.ne.s32.totalorder %s231, %s233
      %p240 = scmp.eq.s32.totalorder %s34, 1
      %p241 = por %p239, %p240
      %p242 = scmp.ne.s32.totalorder %s233, %s234
      %p243 = scmp.eq.s32.totalorder %s34, 0
      %p244 = por %p242, %p243
      %p245 = scmp.ne.s32.totalorder %s233, %s234
      %p246 = scmp.eq.s32.totalorder %s35, 1
      %p247 = por %p245, %p246
      %p249 = scmp.ne.s32.totalorder %s234, %s248
      %p250 = scmp.eq.s32.totalorder %s35, 0
      %p251 = por %p249, %p250
      %s253 = sadd.s32 %s252, 1
      %p256 = scmp.eq.s32.totalorder %s29, 1
      %p257 = scmp.ne.s32.totalorder %s252, %s254
      %p258 = scmp.eq.s32.totalorder %s29, 0
      %p259 = por %p257, %p258
      %p260 = scmp.ne.s32.totalorder %s252, %s254
      %p261 = scmp.eq.s32.totalorder %s34, 1
      %p262 = por %p260, %p261
      %p263 = scmp.ne.s32.totalorder %s254, %s255
      %p264 = scmp.eq.s32.totalorder %s34, 0
      %p265 = por %p263, %p264
      %p266 = scmp.ne.s32.totalorder %s254, %s255
      %p267 = scmp.eq.s32.totalorder %s35, 1
      %p268 = por %p266, %p267
      %p270 = scmp.ne.s32.totalorder %s255, %s269
      %p271 = scmp.eq.s32.totalorder %s35, 0
      %p272 = por %p270, %p271
      %s274 = sadd.s32 %s273, 1
      %p277 = scmp.eq.s32.totalorder %s29, 1
      %p278 = scmp.ne.s32.totalorder %s273, %s275
      %p279 = scmp.eq.s32.totalorder %s29, 0
      %p280 = por %p278, %p279
      %p281 = scmp.ne.s32.totalorder %s273, %s275
      %p282 = scmp.eq.s32.totalorder %s34, 1
      %p283 = por %p281, %p282
      %p284 = scmp.ne.s32.totalorder %s275, %s276
      %p285 = scmp.eq.s32.totalorder %s34, 0
      %p286 = por %p284, %p285
      %p287 = scmp.ne.s32.totalorder %s275, %s276
      %p288 = scmp.eq.s32.totalorder %s35, 1
      %p289 = por %p287, %p288
      %p291 = scmp.ne.s32.totalorder %s276, %s290
      %p292 = scmp.eq.s32.totalorder %s35, 0
      %p293 = por %p291, %p292
      %s295 = sadd.s32 %s294, 1
      %p298 = scmp.eq.s32.totalorder %s29, 1
      %p299 = scmp.ne.s32.totalorder %s294, %s296
      %p300 = scmp.eq.s32.totalorder %s29, 0
      %p301 = por %p299, %p300
      %p302 = scmp.ne.s32.totalorder %s294, %s296
      %p303 = scmp.eq.s32.totalorder %s34, 1
      %p304 = por %p302, %p303
      %p305 = scmp.ne.s32.totalorder %s296, %s297
      %p306 = scmp.eq.s32.totalorder %s34, 0
      %p307 = por %p305, %p306
      %p308 = scmp.ne.s32.totalorder %s296, %s297
      %p309 = scmp.eq.s32.totalorder %s35, 1
      %p310 = por %p308, %p309
      %p312 = scmp.ne.s32.totalorder %s297, %s311
      %p313 = scmp.eq.s32.totalorder %s35, 0
      %p314 = por %p312, %p313
      %s316 = sadd.s32 %s315, 1
      %p319 = scmp.eq.s32.totalorder %s29, 1
      %p320 = scmp.ne.s32.totalorder %s315, %s317
      %p321 = scmp.eq.s32.totalorder %s29, 0
      %p322 = por %p320, %p321
      %p323 = scmp.ne.s32.totalorder %s315, %s317
      %p324 = scmp.eq.s32.totalorder %s34, 1
      %p325 = por %p323, %p324
      %p326 = scmp.ne.s32.totalorder %s317, %s318
      %p327 = scmp.eq.s32.totalorder %s34, 0
      %p328 = por %p326, %p327
      %p329 = scmp.ne.s32.totalorder %s317, %s318
      %p330 = scmp.eq.s32.totalorder %s35, 1
      %p331 = por %p329, %p330
      %p333 = scmp.ne.s32.totalorder %s318, %s332
      %p334 = scmp.eq.s32.totalorder %s35, 0
      %p335 = por %p333, %p334
      %s336 = ssub.s32 %s29, %s36
      %p337 = scmp.eq.s32.totalorder %s336, 0
      %s339 = sadd.s32 %s338, 1
      %s340 = scalar_select %p337, %s338, %s339
      %p343 = pneg %p337
      %p344 = scmp.eq.s32.totalorder %s29, 1
      %p345 = por %p343, %p344
      %p346 = scmp.ne.s32.totalorder %s338, %s341
      %p347 = scmp.eq.s32.totalorder %s29, 0
      %p348 = por %p346, %p347
      %p349 = scmp.ne.s32.totalorder %s338, %s341
      %p350 = scmp.eq.s32.totalorder %s34, 1
      %p351 = por %p349, %p350
      %p352 = scmp.ne.s32.totalorder %s341, %s342
      %p353 = scmp.eq.s32.totalorder %s34, 0
      %p354 = por %p352, %p353
      %p355 = scmp.ne.s32.totalorder %s341, %s342
      %p356 = scmp.eq.s32.totalorder %s35, 1
      %p357 = por %p355, %p356
      %p359 = scmp.ne.s32.totalorder %s342, %s358
      %p360 = scmp.eq.s32.totalorder %s35, 0
      %p361 = por %p359, %p360
      %p362 = scmp.le.s32.totalorder 1, %s29
      %p363 = scmp.lt.s32.totalorder %s29, 3
      %p364 = pnand %p362, %p363
      %p365 = pneg %p364
      // Predicated region
      $region9: #{tpu_custom_call.1} parent=5 // pred_check
        _
      $region10: #{tpu_custom_call.1} parent=5 // pred_check_branch
        %367 = sbr.rel (%p364) target = $region12
      $region11: #{tpu_custom_call.1} parent=5 // pred_region
        %s368 = ssub.s32 %s29, 1
        // Predicated region
        $region13: #{tpu_custom_call.1} parent=11 // pred_check
          %p369 = pneg %p76
        $region14: #{tpu_custom_call.1} parent=11 // pred_check_branch
          %371 = sbr.rel (%p369) target = $region16
        $region15: #{tpu_custom_call.1} parent=11 // pred_region
          %s373 = ssub.s32 6144, 6144
          %374 = vsyncadd [#allocation6], %s373
          %s375 = sshll.u32 [#allocation5], 4
          %s376 = int_to_ptr.vmem [resolvable:$true] %s375
          %381 = dma.hbm_to_vmem [thread:$0]  %s1, 6144, %s376, [#allocation6], 384, 384, 24
        $region16: #{tpu_custom_call.1} parent=11 // pred_fallthru
          _
        // Predicated region
        $region17: #{tpu_custom_call.1} parent=11 // pred_check
          %p382 = pneg %p97
        $region18: #{tpu_custom_call.1} parent=11 // pred_check_branch
          %384 = sbr.rel (%p382) target = $region20
        $region19: #{tpu_custom_call.1} parent=11 // pred_region
          _
        $region20: #{tpu_custom_call.1} parent=11 // pred_fallthru
          _
        // Predicated region
        $region21: #{tpu_custom_call.1} parent=11 // pred_check
          %p385 = pneg %p118
        $region22: #{tpu_custom_call.1} parent=11 // pred_check_branch
          %387 = sbr.rel (%p385) target = $region24
        $region23: #{tpu_custom_call.1} parent=11 // pred_region
          %s389 = ssub.s32 2048, 2048
          %390 = vsyncadd [#allocation6], %s389
          %s391 = sshll.u32 [#allocation7], 4
          %s392 = int_to_ptr.vmem [resolvable:$true] %s391
          %397 = dma.hbm_to_vmem [thread:$0]  %s3, 2048, %s392, [#allocation6], 128, 128, 8
        $region24: #{tpu_custom_call.1} parent=11 // pred_fallthru
          _
        // Predicated region
        $region25: #{tpu_custom_call.1} parent=11 // pred_check
          %p398 = pneg %p139
        $region26: #{tpu_custom_call.1} parent=11 // pred_check_branch
          %400 = sbr.rel (%p398) target = $region28
        $region27: #{tpu_custom_call.1} parent=11 // pred_region
          _
        $region28: #{tpu_custom_call.1} parent=11 // pred_fallthru
          _
        // Predicated region
        $region29: #{tpu_custom_call.1} parent=11 // pred_check
          %p401 = pneg %p160
        $region30: #{tpu_custom_call.1} parent=11 // pred_check_branch
          %403 = sbr.rel (%p401) target = $region32
        $region31: #{tpu_custom_call.1} parent=11 // pred_region
          %s405 = ssub.s32 8192, 8192
          %406 = vsyncadd [#allocation9], %s405
          %s407 = sshll.u32 [#allocation8], 4
          %s408 = int_to_ptr.vmem [resolvable:$true] %s407
          %413 = dma.hbm_to_vmem [thread:$0]  %s5, 8192, %s408, [#allocation9], 512, 512, 32
        $region32: #{tpu_custom_call.1} parent=11 // pred_fallthru
          _
        // Predicated region
        $region33: #{tpu_custom_call.1} parent=11 // pred_check
          %p414 = pneg %p181
        $region34: #{tpu_custom_call.1} parent=11 // pred_check_branch
          %416 = sbr.rel (%p414) target = $region36
        $region35: #{tpu_custom_call.1} parent=11 // pred_region
          _
        $region36: #{tpu_custom_call.1} parent=11 // pred_fallthru
          _
        // Predicated region
        $region37: #{tpu_custom_call.1} parent=11 // pred_check
          %p417 = pneg %p202
        $region38: #{tpu_custom_call.1} parent=11 // pred_check_branch
          %419 = sbr.rel (%p417) target = $region40
        $region39: #{tpu_custom_call.1} parent=11 // pred_region
          %s421 = ssub.s32 8192, 8192
          %422 = vsyncadd [#allocation9], %s421
          %s423 = sshll.u32 [#allocation10], 4
          %s424 = int_to_ptr.vmem [resolvable:$true] %s423
          %429 = dma.hbm_to_vmem [thread:$0]  %s7, 8192, %s424, [#allocation9], 128, 128, 8
        $region40: #{tpu_custom_call.1} parent=11 // pred_fallthru
          _
        // Predicated region
        $region41: #{tpu_custom_call.1} parent=11 // pred_check
          %p430 = pneg %p223
        $region42: #{tpu_custom_call.1} parent=11 // pred_check_branch
          %432 = sbr.rel (%p430) target = $region44
        $region43: #{tpu_custom_call.1} parent=11 // pred_region
          _
        $region44: #{tpu_custom_call.1} parent=11 // pred_fallthru
          _
        // Predicated region
        $region45: #{tpu_custom_call.1} parent=11 // pred_check
          %p433 = pneg %p244
        $region46: #{tpu_custom_call.1} parent=11 // pred_check_branch
          %435 = sbr.rel (%p433) target = $region48
        $region47: #{tpu_custom_call.1} parent=11 // pred_region
          _
        $region48: #{tpu_custom_call.1} parent=11 // pred_fallthru
          _
        // Predicated region
        $region49: #{tpu_custom_call.1} parent=11 // pred_check
          %p436 = pneg %p265
        $region50: #{tpu_custom_call.1} parent=11 // pred_check_branch
          %438 = sbr.rel (%p436) target = $region52
        $region51: #{tpu_custom_call.1} parent=11 // pred_region
          _
        $region52: #{tpu_custom_call.1} parent=11 // pred_fallthru
          _
        // Predicated region
        $region53: #{tpu_custom_call.1} parent=11 // pred_check
          %p439 = pneg %p286
        $region54: #{tpu_custom_call.1} parent=11 // pred_check_branch
          %441 = sbr.rel (%p439) target = $region56
        $region55: #{tpu_custom_call.1} parent=11 // pred_region
          _
        $region56: #{tpu_custom_call.1} parent=11 // pred_fallthru
          _
        // Predicated region
        $region57: #{tpu_custom_call.1} parent=11 // pred_check
          %p442 = pneg %p307
        $region58: #{tpu_custom_call.1} parent=11 // pred_check_branch
          %444 = sbr.rel (%p442) target = $region60
        $region59: #{tpu_custom_call.1} parent=11 // pred_region
          _
        $region60: #{tpu_custom_call.1} parent=11 // pred_fallthru
          _
        // Predicated region
        $region61: #{tpu_custom_call.1} parent=11 // pred_check
          %p445 = pneg %p328
        $region62: #{tpu_custom_call.1} parent=11 // pred_check_branch
          %447 = sbr.rel (%p445) target = $region64
        $region63: #{tpu_custom_call.1} parent=11 // pred_region
          %s449 = ssub.s32 2048, 2048
          %450 = vsyncadd [#allocation12], %s449
          %s451 = sshll.u32 [#allocation11], 4
          %s452 = int_to_ptr.vmem [resolvable:$true] %s451
          %457 = dma.hbm_to_vmem [thread:$0]  %s13, 2048, %s452, [#allocation12], 128, 128, 8
        $region64: #{tpu_custom_call.1} parent=11 // pred_fallthru
          _
      $region12: #{tpu_custom_call.1} parent=5 // pred_fallthru
        _
      %p458 = scmp.lt.s32.totalorder %s29, 2
      // Predicated region
      $region65: #{tpu_custom_call.1} parent=5 // pred_check
        %p459 = pneg %p458
      $region66: #{tpu_custom_call.1} parent=5 // pred_check_branch
        %461 = sbr.rel (%p459) target = $region68
      $region67: #{tpu_custom_call.1} parent=5 // pred_region
        // Predicated region
        $region69: #{tpu_custom_call.1} parent=67 // pred_check
          %p462 = pneg %p49
        $region70: #{tpu_custom_call.1} parent=67 // pred_check_branch
          %464 = sbr.rel (%p462) target = $region72
        $region71: #{tpu_custom_call.1} parent=67 // pred_region
          %s465 = sand.u32 %s39, 1
          %s466 = scalar_lea.sflag [#allocation3], %s465
          %s467 = sand.u32 %s39, 1
          %s468 = smul.addr %s467, 16
          %s469 = scalar_lea.vmem [#allocation2], %s468
          %s471 = ssub.s32 256, 256
          %472 = vsyncadd %s466, %s471
          %s473 = smul.addr %s29, 2
          %s474 = smul.addr %s473, 128
          %s475 = scalar_lea.hbm %s0, %s474
          %s476 = sshll.u32 %s469, 4
          %s477 = int_to_ptr.vmem [resolvable:$true] %s476
          %482 = dma.hbm_to_vmem [thread:$0]  %s475, 256, %s477, %s466, 128, 128, 8
        $region72: #{tpu_custom_call.1} parent=67 // pred_fallthru
          _
      $region68: #{tpu_custom_call.1} parent=5 // pred_fallthru
        _
      %p483 = scmp.le.s32.totalorder 1, %s29
      %p484 = scmp.lt.s32.totalorder %s29, 3
      %p485 = pnand %p483, %p484
      %p486 = pneg %p485
      // Predicated region
      $region73: #{tpu_custom_call.1} parent=5 // pred_check
        _
      $region74: #{tpu_custom_call.1} parent=5 // pred_check_branch
        %488 = sbr.rel (%p485) target = $region76
      $region75: #{tpu_custom_call.1} parent=5 // pred_region
        %s489 = ssub.s32 %s29, 1
        %s490 = sand.u32 %s42, 1
        %s491 = scalar_lea.sflag [#allocation3], %s490
        %s492 = sand.u32 %s42, 1
        %s493 = smul.addr %s492, 16
        %s494 = scalar_lea.vmem [#allocation2], %s493
        // Predicated region
        $region77: #{tpu_custom_call.1} parent=75 // pred_check
          %p495 = pneg %p55
        $region78: #{tpu_custom_call.1} parent=75 // pred_check_branch
          %497 = sbr.rel (%p495) target = $region80
        $region79: #{tpu_custom_call.1} parent=75 // pred_region
          %498 = dma.done %s491, 256
        $region80: #{tpu_custom_call.1} parent=75 // pred_fallthru
          _
        // Predicated region
        $region81: #{tpu_custom_call.1} parent=75 // pred_check
          %p499 = pneg %p76
        $region82: #{tpu_custom_call.1} parent=75 // pred_check_branch
          %501 = sbr.rel (%p499) target = $region84
        $region83: #{tpu_custom_call.1} parent=75 // pred_region
          %502 = dma.done [#allocation6], 6144
        $region84: #{tpu_custom_call.1} parent=75 // pred_fallthru
          _
        // Predicated region
        $region85: #{tpu_custom_call.1} parent=75 // pred_check
          %p503 = pneg %p118
        $region86: #{tpu_custom_call.1} parent=75 // pred_check_branch
          %505 = sbr.rel (%p503) target = $region88
        $region87: #{tpu_custom_call.1} parent=75 // pred_region
          %506 = dma.done [#allocation6], 2048
        $region88: #{tpu_custom_call.1} parent=75 // pred_fallthru
          _
        // Predicated region
        $region89: #{tpu_custom_call.1} parent=75 // pred_check
          %p507 = pneg %p160
        $region90: #{tpu_custom_call.1} parent=75 // pred_check_branch
          %509 = sbr.rel (%p507) target = $region92
        $region91: #{tpu_custom_call.1} parent=75 // pred_region
          %510 = dma.done [#allocation9], 8192
        $region92: #{tpu_custom_call.1} parent=75 // pred_fallthru
          _
        // Predicated region
        $region93: #{tpu_custom_call.1} parent=75 // pred_check
          %p511 = pneg %p202
        $region94: #{tpu_custom_call.1} parent=75 // pred_check_branch
          %513 = sbr.rel (%p511) target = $region96
        $region95: #{tpu_custom_call.1} parent=75 // pred_region
          %514 = dma.done [#allocation9], 8192
        $region96: #{tpu_custom_call.1} parent=75 // pred_fallthru
          _
        // Predicated region
        $region97: #{tpu_custom_call.1} parent=75 // pred_check
          %p515 = pneg %p328
        $region98: #{tpu_custom_call.1} parent=75 // pred_check_branch
          %517 = sbr.rel (%p515) target = $region100
        $region99: #{tpu_custom_call.1} parent=75 // pred_region
          %518 = dma.done [#allocation12], 2048
        $region100: #{tpu_custom_call.1} parent=75 // pred_fallthru
          _
        %s519 = sand.u32 %s42, 1
        %s520 = scalar_lea.sflag [#allocation3], %s519
        %s521 = sand.u32 %s42, 1
        %s522 = smul.addr %s521, 16
        %s523 = scalar_lea.vmem [#allocation2], %s522
        %p524 = pneg %p55
        %p525 = pneg %p52
        %p526 = pneg %p76
        %p527 = pneg %p73
        %p528 = pneg %p97
        %p529 = pneg %p94
        %p530 = pneg %p118
        %p531 = pneg %p115
        %p532 = pneg %p139
        %p533 = pneg %p136
        %p534 = pneg %p160
        %p535 = pneg %p157
        %p536 = pneg %p181
        %p537 = pneg %p178
        %p538 = pneg %p202
        %p539 = pneg %p199
        %p540 = pneg %p223
        %p541 = pneg %p220
        %p542 = pneg %p244
        %p543 = pneg %p241
        %p544 = pneg %p265
        %p545 = pneg %p262
        %p546 = pneg %p286
        %p547 = pneg %p283
        %p548 = pneg %p307
        %p549 = pneg %p304
        %p550 = pneg %p328
        %p551 = pneg %p325
        %p552 = pneg %p354
        %p553 = pneg %p351
        %s554 = sand.u32 %s341, 1
        %s555 = scalar_lea.sflag [#allocation4], %s554
        %s556 = sand.u32 %s341, 1
        %s557 = smul.addr %s556, 16
        %s558 = scalar_lea.vmem [#allocation13], %s557
        %v559 = vld [vmem:[%s494] sm:$0xff]
        %v560 = vld [vmem:[%s494 + $0x8] sm:$0xff]
        %v561 = vld [vmem:[%s9] sm:$0x1]
        %v562 = vld [vmem:[%s10] sm:$0x1]
        %563 = vadd.xlane.f32.xlu0 %v559
        %v564 = vpop.xlane.xlu0 %563
        %565 = vadd.xlane.f32.xlu0 %v560
        %v566 = vpop.xlane.xlu0 %565
        %v567 = vrcp.pop 128.0
        %v568 = vmul.f32 %v564, %v567
        %v569 = vmul.f32 %v566, %v567
        %v570 = vsub.f32 %v559, %v568
        %v571 = vsub.f32 %v560, %v569
        %v572 = vmul.f32 %v570, %v570
        %v573 = vmul.f32 %v571, %v571
        %574 = vadd.xlane.f32.xlu0 %v572
        %v575 = vpop.xlane.xlu0 %574
        %576 = vadd.xlane.f32.xlu0 %v573
        %v577 = vpop.xlane.xlu0 %576
        %v578 = vmul.f32 %v575, 0.007874016
        %v579 = vmul.f32 %v577, 0.007874016
        %v580 = vrsqrt.pop %v578
        %v581 = vmul.f32 %v578, %v580
        %vm582 = vcmp.eq.f32.partialorder %v578, inf
        %v583 = vsel %vm582, %v578, %v581
        %vm584 = vcmp.eq.f32.partialorder %v578, 0.0
        %v585 = vand.u32 %v578, 2147483648
        %v586 = vsel %vm584, %v585, %v583
        %v587 = vrsqrt.pop %v579
        %v588 = vmul.f32 %v579, %v587
        %vm589 = vcmp.eq.f32.partialorder %v579, inf
        %v590 = vsel %vm589, %v579, %v588
        %vm591 = vcmp.eq.f32.partialorder %v579, 0.0
        %v592 = vand.u32 %v579, 2147483648
        %v593 = vsel %vm591, %v592, %v590
        %v594 = vadd.f32 %v586, 1e-06
        %v595 = vadd.f32 %v593, 1e-06
        %v596 = vrcp.pop %v594
        %v597 = vrcp.pop %v595
        %v598 = vmul.f32 %v570, %v596
        %v599 = vmul.f32 %v571, %v597
        %v601 = vlaneseq
        %v602 = vshrl.u32 %v601, 7
        %v603 = vsub.s32 0, %v602
        %v604 = vrot.slane %v561, %v603
        %v606 = vmul.f32 %v604, %v598
        %v607 = vmul.f32 %v604, %v599
        %v609 = vlaneseq
        %v610 = vshrl.u32 %v609, 7
        %v611 = vsub.s32 0, %v610
        %v612 = vrot.slane %v562, %v611
        %v614 = vadd.f32 %v606, %v612
        %v615 = vadd.f32 %v607, %v612
        %v616 = vld [vmem:[#allocation5] sm:$0xff]
        %v617 = vld [vmem:[#allocation5 + $0x8] sm:$0xff]
        %v618 = vld [vmem:[#allocation5 + $0x10] sm:$0xff]
        %v619 = vld [vmem:[#allocation5 + $0x18] sm:$0xff]
        %v620 = vld [vmem:[#allocation5 + $0x20] sm:$0xff]
        %v621 = vld [vmem:[#allocation5 + $0x28] sm:$0xff]
        %v622 = vld [vmem:[#allocation5 + $0x30] sm:$0xff]
        %v623 = vld [vmem:[#allocation5 + $0x38] sm:$0xff]
        %v624 = vld [vmem:[#allocation5 + $0x40] sm:$0xff]
        %v625 = vld [vmem:[#allocation5 + $0x48] sm:$0xff]
        %v626 = vld [vmem:[#allocation5 + $0x50] sm:$0xff]
        %v627 = vld [vmem:[#allocation5 + $0x58] sm:$0xff]
        %v628 = vld [vmem:[#allocation5 + $0x60] sm:$0xff]
        %v629 = vld [vmem:[#allocation5 + $0x68] sm:$0xff]
        %v630 = vld [vmem:[#allocation5 + $0x70] sm:$0xff]
        %v631 = vld [vmem:[#allocation5 + $0x78] sm:$0xff]
        %v632 = vld [vmem:[#allocation5 + $0x80] sm:$0xff]
        %v633 = vld [vmem:[#allocation5 + $0x88] sm:$0xff]
        %v634 = vld [vmem:[#allocation5 + $0x90] sm:$0xff]
        %v635 = vld [vmem:[#allocation5 + $0x98] sm:$0xff]
        %v636 = vld [vmem:[#allocation5 + $0xa0] sm:$0xff]
        %v637 = vld [vmem:[#allocation5 + $0xa8] sm:$0xff]
        %v638 = vld [vmem:[#allocation5 + $0xb0] sm:$0xff]
        %v639 = vld [vmem:[#allocation5 + $0xb8] sm:$0xff]
        %v640 = vld [vmem:[#allocation5 + $0xc0] sm:$0xff]
        %v641 = vld [vmem:[#allocation5 + $0xc8] sm:$0xff]
        %v642 = vld [vmem:[#allocation5 + $0xd0] sm:$0xff]
        %v643 = vld [vmem:[#allocation5 + $0xd8] sm:$0xff]
        %v644 = vld [vmem:[#allocation5 + $0xe0] sm:$0xff]
        %v645 = vld [vmem:[#allocation5 + $0xe8] sm:$0xff]
        %v646 = vld [vmem:[#allocation5 + $0xf0] sm:$0xff]
        %v647 = vld [vmem:[#allocation5 + $0xf8] sm:$0xff]
        %v648 = vld [vmem:[#allocation5 + $0x100] sm:$0xff]
        %v649 = vld [vmem:[#allocation5 + $0x108] sm:$0xff]
        %v650 = vld [vmem:[#allocation5 + $0x110] sm:$0xff]
        %v651 = vld [vmem:[#allocation5 + $0x118] sm:$0xff]
        %v652 = vld [vmem:[#allocation5 + $0x120] sm:$0xff]
        %v653 = vld [vmem:[#allocation5 + $0x128] sm:$0xff]
        %v654 = vld [vmem:[#allocation5 + $0x130] sm:$0xff]
        %v655 = vld [vmem:[#allocation5 + $0x138] sm:$0xff]
        %v656 = vld [vmem:[#allocation5 + $0x140] sm:$0xff]
        %v657 = vld [vmem:[#allocation5 + $0x148] sm:$0xff]
        %v658 = vld [vmem:[#allocation5 + $0x150] sm:$0xff]
        %v659 = vld [vmem:[#allocation5 + $0x158] sm:$0xff]
        %v660 = vld [vmem:[#allocation5 + $0x160] sm:$0xff]
        %v661 = vld [vmem:[#allocation5 + $0x168] sm:$0xff]
        %v662 = vld [vmem:[#allocation5 + $0x170] sm:$0xff]
        %v663 = vld [vmem:[#allocation5 + $0x178] sm:$0xff]
        %v664 = vld [vmem:[%s2] sm:$0x7]
        %v666 = vlaneseq
        %v667 = vshrl.u32 %v666, 7
        %v668 = vsub.s32 0, %v667
        %v669 = vrot.slane %v664, %v668
        %v670 = vlaneseq
        %v671 = vshrl.u32 %v670, 7
        %v672 = vsub.s32 1, %v671
        %v673 = vrot.slane %v664, %v672
        %v674 = vlaneseq
        %v675 = vshrl.u32 %v674, 7
        %v676 = vsub.s32 2, %v675
        %v677 = vrot.slane %v664, %v676
        %681 = vmatprep.subr.mxu0 %v617
        %682 = vmatpush1.msra.mxu0 %v616
        %683 = vmatprep.subr.mxu0 %v620
        %684 = vmatpush1.msra.mxu0 %v619
        %685 = vmatprep.subr.mxu0 %v623
        %686 = vmatpush1.msra.mxu0 %v622
        %687 = vmatprep.subr.mxu0 %v626
        %688 = vmatpush1.msra.mxu0 %v625
        %689 = vmatprep.subr.mxu0 %v629
        %690 = vmatpush1.msra.mxu0 %v628
        %691 = vmatprep.subr.mxu0 %v632
        %692 = vmatpush1.msra.mxu0 %v631
        %693 = vmatprep.subr.mxu0 %v635
        %694 = vmatpush1.msra.mxu0 %v634
        %695 = vmatprep.subr.mxu0 %v638
        %696 = vmatpush1.msra.mxu0 %v637
        %697 = vmatprep.subr.mxu0 %v641
        %698 = vmatpush1.msra.mxu0 %v640
        %699 = vmatprep.subr.mxu0 %v644
        %700 = vmatpush1.msra.mxu0 %v643
        %701 = vmatprep.subr.mxu0 %v647
        %702 = vmatpush1.msra.mxu0 %v646
        %703 = vmatprep.subr.mxu0 %v650
        %704 = vmatpush1.msra.mxu0 %v649
        %705 = vmatprep.subr.mxu0 %v653
        %706 = vmatpush1.msra.mxu0 %v652
        %707 = vmatprep.subr.mxu0 %v656
        %708 = vmatpush1.msra.mxu0 %v655
        %709 = vmatprep.subr.mxu0 %v659
        %710 = vmatpush1.msra.mxu0 %v658
        %711 = vmatprep.subr.mxu0 %v662
        %712 = vmatpush1.msra.mxu0 %v661
        %713 = vmatprep.subr.mxu0 0.0
        %714 = vmatpush1.msra.mxu0 0.0
        %715 = vmatprep.subr.mxu0 0.0
        %716 = vmatpush1.msra.mxu0 0.0
        %717 = vmatprep.subr.mxu0 0.0
        %718 = vmatpush1.msra.mxu0 0.0
        %719 = vmatprep.subr.mxu0 0.0
        %720 = vmatpush1.msra.mxu0 0.0
        %721 = vmatprep.subr.mxu0 0.0
        %722 = vmatpush1.msra.mxu0 0.0
        %723 = vmatprep.subr.mxu0 0.0
        %724 = vmatpush1.msra.mxu0 0.0
        %725 = vmatprep.subr.mxu0 0.0
        %726 = vmatpush1.msra.mxu0 0.0
        %727 = vmatprep.subr.mxu0 0.0
        %728 = vmatpush1.msra.mxu0 0.0
        %729 = vmatprep.subr.mxu0 0.0
        %730 = vmatpush1.msra.mxu0 0.0
        %731 = vmatprep.subr.mxu0 0.0
        %732 = vmatpush1.msra.mxu0 0.0
        %733 = vmatprep.subr.mxu0 0.0
        %734 = vmatpush1.msra.mxu0 0.0
        %735 = vmatprep.subr.mxu0 0.0
        %736 = vmatpush1.msra.mxu0 0.0
        %737 = vmatprep.subr.mxu0 0.0
        %738 = vmatpush1.msra.mxu0 0.0
        %739 = vmatprep.subr.mxu0 0.0
        %740 = vmatpush1.msra.mxu0 0.0
        %741 = vmatprep.subr.mxu0 0.0
        %742 = vmatpush1.msra.mxu0 0.0
        %743 = vmatprep.subr.mxu0 0.0
        %744 = vmatpush1.msra.mxu0 0.0
        %745 = vmatprep.mubr.f32.mxu0 0.0
        %746 = vmatmul.mubr.f32.gmra.mrb[0].mxu0 %v614
        %v747 = vpop.f32.mrb[0].mxu0
        %v748 = vadd.f32 %v669, %v747
        %v749 = vpop.f32.mrb[0].mxu0
        %v750 = vadd.f32 %v673, %v749
        %751 = vmatprep.mubr.f32.mxu0 0.0
        %752 = vmatmul.mubr.f32.gmra.mrb[0].mxu0 %v615
        %v753 = vpop.f32.mrb[0].mxu0
        %v754 = vadd.f32 %v669, %v753
        %v755 = vpop.f32.mrb[0].mxu0
        %v756 = vadd.f32 %v673, %v755
        %757 = vdwg.mxu0
        %758 = vmatprep.subr.mxu0 0.0
        %759 = vmatpush1.msra.mxu0 %v618
        %760 = vmatprep.subr.mxu0 0.0
        %761 = vmatpush1.msra.mxu0 %v621
        %762 = vmatprep.subr.mxu0 0.0
        %763 = vmatpush1.msra.mxu0 %v624
        %764 = vmatprep.subr.mxu0 0.0
        %765 = vmatpush1.msra.mxu0 %v627
        %766 = vmatprep.subr.mxu0 0.0
        %767 = vmatpush1.msra.mxu0 %v630
        %768 = vmatprep.subr.mxu0 0.0
        %769 = vmatpush1.msra.mxu0 %v633
        %770 = vmatprep.subr.mxu0 0.0
        %771 = vmatpush1.msra.mxu0 %v636
        %772 = vmatprep.subr.mxu0 0.0
        %773 = vmatpush1.msra.mxu0 %v639
        %774 = vmatprep.subr.mxu0 0.0
        %775 = vmatpush1.msra.mxu0 %v642
        %776 = vmatprep.subr.mxu0 0.0
        %777 = vmatpush1.msra.mxu0 %v645
        %778 = vmatprep.subr.mxu0 0.0
        %779 = vmatpush1.msra.mxu0 %v648
        %780 = vmatprep.subr.mxu0 0.0
        %781 = vmatpush1.msra.mxu0 %v651
        %782 = vmatprep.subr.mxu0 0.0
        %783 = vmatpush1.msra.mxu0 %v654
        %784 = vmatprep.subr.mxu0 0.0
        %785 = vmatpush1.msra.mxu0 %v657
        %786 = vmatprep.subr.mxu0 0.0
        %787 = vmatpush1.msra.mxu0 %v660
        %788 = vmatprep.subr.mxu0 0.0
        %789 = vmatpush1.msra.mxu0 %v663
        %790 = vmatprep.subr.mxu0 0.0
        %791 = vmatpush1.msra.mxu0 0.0
        %792 = vmatprep.subr.mxu0 0.0
        %793 = vmatpush1.msra.mxu0 0.0
        %794 = vmatprep.subr.mxu0 0.0
        %795 = vmatpush1.msra.mxu0 0.0
        %796 = vmatprep.subr.mxu0 0.0
        %797 = vmatpush1.msra.mxu0 0.0
        %798 = vmatprep.subr.mxu0 0.0
        %799 = vmatpush1.msra.mxu0 0.0
        %800 = vmatprep.subr.mxu0 0.0
        %801 = vmatpush1.msra.mxu0 0.0
        %802 = vmatprep.subr.mxu0 0.0
        %803 = vmatpush1.msra.mxu0 0.0
        %804 = vmatprep.subr.mxu0 0.0
        %805 = vmatpush1.msra.mxu0 0.0
        %806 = vmatprep.subr.mxu0 0.0
        %807 = vmatpush1.msra.mxu0 0.0
        %808 = vmatprep.subr.mxu0 0.0
        %809 = vmatpush1.msra.mxu0 0.0
        %810 = vmatprep.subr.mxu0 0.0
        %811 = vmatpush1.msra.mxu0 0.0
        %812 = vmatprep.subr.mxu0 0.0
        %813 = vmatpush1.msra.mxu0 0.0
        %814 = vmatprep.subr.mxu0 0.0
        %815 = vmatpush1.msra.mxu0 0.0
        %816 = vmatprep.subr.mxu0 0.0
        %817 = vmatpush1.msra.mxu0 0.0
        %818 = vmatprep.subr.mxu0 0.0
        %819 = vmatpush1.msra.mxu0 0.0
        %820 = vmatprep.subr.mxu0 0.0
        %821 = vmatpush1.msra.mxu0 0.0
        %822 = vmatprep.mubr.f32.mxu0 0.0
        %823 = vmatmul.mubr.f32.gmra.mrb[0].mxu0 %v614
        %v824 = vpop.f32.mrb[0].mxu0
        %v825 = vadd.f32 %v677, %v824
        %v826 = vpop.f32.mrb[0].mxu0
        %827 = vmatprep.mubr.f32.mxu0 0.0
        %828 = vmatmul.mubr.f32.gmra.mrb[0].mxu0 %v615
        %v829 = vpop.f32.mrb[0].mxu0
        %v830 = vadd.f32 %v677, %v829
        %v831 = vpop.f32.mrb[0].mxu0
        %832 = vdwg.mxu0
        %833 = vxpose.xlu0.b32.start [1/16] %v750, 128
        %834 = vxpose.xlu0.b32.cont [2/16] %v756, 128
        %835 = vxpose.xlu0.b32.cont [3/16] 0.0, 128
        %836 = vxpose.xlu0.b32.cont [4/16] 0.0, 128
        %837 = vxpose.xlu0.b32.cont [5/16] 0.0, 128
        %838 = vxpose.xlu0.b32.cont [6/16] 0.0, 128
        %839 = vxpose.xlu0.b32.cont [7/16] 0.0, 128
        %840 = vxpose.xlu0.b32.cont [8/16] 0.0, 128
        %841 = vxpose.xlu0.b32.cont [9/16] 0.0, 128
        %842 = vxpose.xlu0.b32.cont [10/16] 0.0, 128
        %843 = vxpose.xlu0.b32.cont [11/16] 0.0, 128
        %844 = vxpose.xlu0.b32.cont [12/16] 0.0, 128
        %845 = vxpose.xlu0.b32.cont [13/16] 0.0, 128
        %846 = vxpose.xlu0.b32.cont [14/16] 0.0, 128
        %847 = vxpose.xlu0.b32.cont [15/16] 0.0, 128
        %848 = vxpose.xlu0.b32.end [16/16] 0.0, 128
        %v849 = vpop.trf.xlu0
        %v850 = vpop.trf.xlu0
        %v851 = vpop.trf.xlu0
        %v852 = vpop.trf.xlu0
        %v853 = vpop.trf.xlu0
        %v854 = vpop.trf.xlu0
        %v855 = vpop.trf.xlu0
        %v856 = vpop.trf.xlu0
        %v857 = vpop.trf.xlu0
        %v858 = vpop.trf.xlu0
        %v859 = vpop.trf.xlu0
        %v860 = vpop.trf.xlu0
        %v861 = vpop.trf.xlu0
        %v862 = vpop.trf.xlu0
        %v863 = vpop.trf.xlu0
        %v864 = vpop.trf.xlu0
        %vm865 = vcmask 130048
        %v867 = vsel %vm865, %v849, 0
        %v870 = vsel %vm865, %v850, 0
        %v873 = vsel %vm865, %v851, 0
        %v876 = vsel %vm865, %v852, 0
        %v879 = vsel %vm865, %v853, 0
        %v882 = vsel %vm865, %v854, 0
        %v885 = vsel %vm865, %v855, 0
        %v888 = vsel %vm865, %v856, 0
        %v891 = vsel %vm865, %v857, 0
        %v894 = vsel %vm865, %v858, 0
        %v897 = vsel %vm865, %v859, 0
        %v900 = vsel %vm865, %v860, 0
        %v903 = vsel %vm865, %v861, 0
        %v906 = vsel %vm865, %v862, 0
        %v909 = vsel %vm865, %v863, 0
        %v912 = vsel %vm865, %v864, 0
        %914 = vmatprep.subr.mxu0 0.0
        %915 = vmatpush1.msra.mxu0 %v825
        %916 = vmatprep.subr.mxu0 0.0
        %917 = vmatpush1.msra.mxu0 %v830
        %918 = vmatprep.subr.mxu0 0.0
        %919 = vmatpush1.msra.mxu0 0.0
        %920 = vmatprep.subr.mxu0 0.0
        %921 = vmatpush1.msra.mxu0 0.0
        %922 = vmatprep.subr.mxu0 0.0
        %923 = vmatpush1.msra.mxu0 0.0
        %924 = vmatprep.subr.mxu0 0.0
        %925 = vmatpush1.msra.mxu0 0.0
        %926 = vmatprep.subr.mxu0 0.0
        %927 = vmatpush1.msra.mxu0 0.0
        %928 = vmatprep.subr.mxu0 0.0
        %929 = vmatpush1.msra.mxu0 0.0
        %930 = vmatprep.subr.mxu0 0.0
        %931 = vmatpush1.msra.mxu0 0.0
        %932 = vmatprep.subr.mxu0 0.0
        %933 = vmatpush1.msra.mxu0 0.0
        %934 = vmatprep.subr.mxu0 0.0
        %935 = vmatpush1.msra.mxu0 0.0
        %936 = vmatprep.subr.mxu0 0.0
        %937 = vmatpush1.msra.mxu0 0.0
        %938 = vmatprep.subr.mxu0 0.0
        %939 = vmatpush1.msra.mxu0 0.0
        %940 = vmatprep.subr.mxu0 0.0
        %941 = vmatpush1.msra.mxu0 0.0
        %942 = vmatprep.subr.mxu0 0.0
        %943 = vmatpush1.msra.mxu0 0.0
        %944 = vmatprep.subr.mxu0 0.0
        %945 = vmatpush1.msra.mxu0 0.0
        %946 = vmatprep.subr.mxu0 0.0
        %947 = vmatpush1.msra.mxu0 0.0
        %948 = vmatprep.subr.mxu0 0.0
        %949 = vmatpush1.msra.mxu0 0.0
        %950 = vmatprep.subr.mxu0 0.0
        %951 = vmatpush1.msra.mxu0 0.0
        %952 = vmatprep.subr.mxu0 0.0
        %953 = vmatpush1.msra.mxu0 0.0
        %954 = vmatprep.subr.mxu0 0.0
        %955 = vmatpush1.msra.mxu0 0.0
        %956 = vmatprep.subr.mxu0 0.0
        %957 = vmatpush1.msra.mxu0 0.0
        %958 = vmatprep.subr.mxu0 0.0
        %959 = vmatpush1.msra.mxu0 0.0
        %960 = vmatprep.subr.mxu0 0.0
        %961 = vmatpush1.msra.mxu0 0.0
        %962 = vmatprep.subr.mxu0 0.0
        %963 = vmatpush1.msra.mxu0 0.0
        %964 = vmatprep.subr.mxu0 0.0
        %965 = vmatpush1.msra.mxu0 0.0
        %966 = vmatprep.subr.mxu0 0.0
        %967 = vmatpush1.msra.mxu0 0.0
        %968 = vmatprep.subr.mxu0 0.0
        %969 = vmatpush1.msra.mxu0 0.0
        %970 = vmatprep.subr.mxu0 0.0
        %971 = vmatpush1.msra.mxu0 0.0
        %972 = vmatprep.subr.mxu0 0.0
        %973 = vmatpush1.msra.mxu0 0.0
        %974 = vmatprep.subr.mxu0 0.0
        %975 = vmatpush1.msra.mxu0 0.0
        %976 = vmatprep.subr.mxu0 0.0
        %977 = vmatpush1.msra.mxu0 0.0
        %978 = vmatprep.mubr.f32.mxu0 0.0
        %979 = vmatmul.mubr.f32.gmra.mrb[0].mxu0 %v867
        %v980 = vpop.f32.mrb[0].mxu0
        %v981 = vadd.f32 0.0, %v980
        %v982 = vpop.f32.mrb[0].mxu0
        %983 = vmatprep.mubr.f32.mxu0 0.0
        %984 = vmatmul.mubr.f32.gmra.mrb[0].mxu0 %v870
        %v985 = vpop.f32.mrb[0].mxu0
        %v986 = vadd.f32 0.0, %v985
        %v987 = vpop.f32.mrb[0].mxu0
        %988 = vmatprep.mubr.f32.mxu0 0.0
        %989 = vmatmul.mubr.f32.gmra.mrb[0].mxu0 %v873
        %v990 = vpop.f32.mrb[0].mxu0
        %v991 = vadd.f32 0.0, %v990
        %v992 = vpop.f32.mrb[0].mxu0
        %993 = vmatprep.mubr.f32.mxu0 0.0
        %994 = vmatmul.mubr.f32.gmra.mrb[0].mxu0 %v876
        %v995 = vpop.f32.mrb[0].mxu0
        %v996 = vadd.f32 0.0, %v995
        %v997 = vpop.f32.mrb[0].mxu0
        %998 = vmatprep.mubr.f32.mxu0 0.0
        %999 = vmatmul.mubr.f32.gmra.mrb[0].mxu0 %v879
        %v1000 = vpop.f32.mrb[0].mxu0
        %v1001 = vadd.f32 0.0, %v1000
        %v1002 = vpop.f32.mrb[0].mxu0
        %1003 = vmatprep.mubr.f32.mxu0 0.0
        %1004 = vmatmul.mubr.f32.gmra.mrb[0].mxu0 %v882
        %v1005 = vpop.f32.mrb[0].mxu0
        %v1006 = vadd.f32 0.0, %v1005
        %v1007 = vpop.f32.mrb[0].mxu0
        %1008 = vmatprep.mubr.f32.mxu0 0.0
        %1009 = vmatmul.mubr.f32.gmra.mrb[0].mxu0 %v885
        %v1010 = vpop.f32.mrb[0].mxu0
        %v1011 = vadd.f32 0.0, %v1010
        %v1012 = vpop.f32.mrb[0].mxu0
        %1013 = vmatprep.mubr.f32.mxu0 0.0
        %1014 = vmatmul.mubr.f32.gmra.mrb[0].mxu0 %v888
        %v1015 = vpop.f32.mrb[0].mxu0
        %v1016 = vadd.f32 0.0, %v1015
        %v1017 = vpop.f32.mrb[0].mxu0
        %1018 = vmatprep.mubr.f32.mxu0 0.0
        %1019 = vmatmul.mubr.f32.gmra.mrb[0].mxu0 %v891
        %v1020 = vpop.f32.mrb[0].mxu0
        %v1021 = vadd.f32 0.0, %v1020
        %v1022 = vpop.f32.mrb[0].mxu0
        %1023 = vmatprep.mubr.f32.mxu0 0.0
        %1024 = vmatmul.mubr.f32.gmra.mrb[0].mxu0 %v894
        %v1025 = vpop.f32.mrb[0].mxu0
        %v1026 = vadd.f32 0.0, %v1025
        %v1027 = vpop.f32.mrb[0].mxu0
        %1028 = vmatprep.mubr.f32.mxu0 0.0
        %1029 = vmatmul.mubr.f32.gmra.mrb[0].mxu0 %v897
        %v1030 = vpop.f32.mrb[0].mxu0
        %v1031 = vadd.f32 0.0, %v1030
        %v1032 = vpop.f32.mrb[0].mxu0
        %1033 = vmatprep.mubr.f32.mxu0 0.0
        %1034 = vmatmul.mubr.f32.gmra.mrb[0].mxu0 %v900
        %v1035 = vpop.f32.mrb[0].mxu0
        %v1036 = vadd.f32 0.0, %v1035
        %v1037 = vpop.f32.mrb[0].mxu0
        %1038 = vmatprep.mubr.f32.mxu0 0.0
        %1039 = vmatmul.mubr.f32.gmra.mrb[0].mxu0 %v903
        %v1040 = vpop.f32.mrb[0].mxu0
        %v1041 = vadd.f32 0.0, %v1040
        %v1042 = vpop.f32.mrb[0].mxu0
        %1043 = vmatprep.mubr.f32.mxu0 0.0
        %1044 = vmatmul.mubr.f32.gmra.mrb[0].mxu0 %v906
        %v1045 = vpop.f32.mrb[0].mxu0
        %v1046 = vadd.f32 0.0, %v1045
        %v1047 = vpop.f32.mrb[0].mxu0
        %1048 = vmatprep.mubr.f32.mxu0 0.0
        %1049 = vmatmul.mubr.f32.gmra.mrb[0].mxu0 %v909
        %v1050 = vpop.f32.mrb[0].mxu0
        %v1051 = vadd.f32 0.0, %v1050
        %v1052 = vpop.f32.mrb[0].mxu0
        %1053 = vmatprep.mubr.f32.mxu0 0.0
        %1054 = vmatmul.mubr.f32.gmra.mrb[0].mxu0 %v912
        %v1055 = vpop.f32.mrb[0].mxu0
        %v1056 = vadd.f32 0.0, %v1055
        %v1057 = vpop.f32.mrb[0].mxu0
        %1058 = vdwg.mxu0
        %v1059 = vld [vmem:[#allocation11] sm:$0xff]
        %v1060 = vld [vmem:[#allocation11 + $0x8] sm:$0xff]
        %v1061 = vld [vmem:[#allocation11 + $0x10] sm:$0xff]
        %v1062 = vld [vmem:[#allocation11 + $0x18] sm:$0xff]
        %v1063 = vld [vmem:[#allocation11 + $0x20] sm:$0xff]
        %v1064 = vld [vmem:[#allocation11 + $0x28] sm:$0xff]
        %v1065 = vld [vmem:[#allocation11 + $0x30] sm:$0xff]
        %v1066 = vld [vmem:[#allocation11 + $0x38] sm:$0xff]
        %v1067 = vld [vmem:[#allocation11 + $0x40] sm:$0xff]
        %v1068 = vld [vmem:[#allocation11 + $0x48] sm:$0xff]
        %v1069 = vld [vmem:[#allocation11 + $0x50] sm:$0xff]
        %v1070 = vld [vmem:[#allocation11 + $0x58] sm:$0xff]
        %v1071 = vld [vmem:[#allocation11 + $0x60] sm:$0xff]
        %v1072 = vld [vmem:[#allocation11 + $0x68] sm:$0xff]
        %v1073 = vld [vmem:[#allocation11 + $0x70] sm:$0xff]
        %v1074 = vld [vmem:[#allocation11 + $0x78] sm:$0xff]
        %v1075 = vmul.f32 %v981, %v1059
        %v1076 = vmul.f32 %v986, %v1060
        %v1077 = vmul.f32 %v991, %v1061
        %v1078 = vmul.f32 %v996, %v1062
        %v1079 = vmul.f32 %v1001, %v1063
        %v1080 = vmul.f32 %v1006, %v1064
        %v1081 = vmul.f32 %v1011, %v1065
        %v1082 = vmul.f32 %v1016, %v1066
        %v1083 = vmul.f32 %v1021, %v1067
        %v1084 = vmul.f32 %v1026, %v1068
        %v1085 = vmul.f32 %v1031, %v1069
        %v1086 = vmul.f32 %v1036, %v1070
        %v1087 = vmul.f32 %v1041, %v1071
        %v1088 = vmul.f32 %v1046, %v1072
        %v1089 = vmul.f32 %v1051, %v1073
        %v1090 = vmul.f32 %v1056, %v1074
        %1091 = vmatprep.subr.mxu0 0.0
        %1092 = vmatpush1.msra.mxu0 %v1075
        %1093 = vmatprep.subr.mxu0 0.0
        %1094 = vmatpush1.msra.mxu0 %v1076
        %1095 = vmatprep.subr.mxu0 0.0
        %1096 = vmatpush1.msra.mxu0 %v1077
        %1097 = vmatprep.subr.mxu0 0.0
        %1098 = vmatpush1.msra.mxu0 %v1078
        %1099 = vmatprep.subr.mxu0 0.0
        %1100 = vmatpush1.msra.mxu0 %v1079
        %1101 = vmatprep.subr.mxu0 0.0
        %1102 = vmatpush1.msra.mxu0 %v1080
        %1103 = vmatprep.subr.mxu0 0.0
        %1104 = vmatpush1.msra.mxu0 %v1081
        %1105 = vmatprep.subr.mxu0 0.0
        %1106 = vmatpush1.msra.mxu0 %v1082
        %1107 = vmatprep.subr.mxu0 0.0
        %1108 = vmatpush1.msra.mxu0 %v1083
        %1109 = vmatprep.subr.mxu0 0.0
        %1110 = vmatpush1.msra.mxu0 %v1084
        %1111 = vmatprep.subr.mxu0 0.0
        %1112 = vmatpush1.msra.mxu0 %v1085
        %1113 = vmatprep.subr.mxu0 0.0
        %1114 = vmatpush1.msra.mxu0 %v1086
        %1115 = vmatprep.subr.mxu0 0.0
        %1116 = vmatpush1.msra.mxu0 %v1087
        %1117 = vmatprep.subr.mxu0 0.0
        %1118 = vmatpush1.msra.mxu0 %v1088
        %1119 = vmatprep.subr.mxu0 0.0
        %1120 = vmatpush1.msra.mxu0 %v1089
        %1121 = vmatprep.subr.mxu0 0.0
        %1122 = vmatpush1.msra.mxu0 %v1090
        %1123 = vmatprep.subr.mxu0 0.0
        %1124 = vmatpush1.msra.mxu0 0.0
        %1125 = vmatprep.subr.mxu0 0.0
        %1126 = vmatpush1.msra.mxu0 0.0
        %1127 = vmatprep.subr.mxu0 0.0
        %1128 = vmatpush1.msra.mxu0 0.0
        %1129 = vmatprep.subr.mxu0 0.0
        %1130 = vmatpush1.msra.mxu0 0.0
        %1131 = vmatprep.subr.mxu0 0.0
        %1132 = vmatpush1.msra.mxu0 0.0
        %1133 = vmatprep.subr.mxu0 0.0
        %1134 = vmatpush1.msra.mxu0 0.0
        %1135 = vmatprep.subr.mxu0 0.0
        %1136 = vmatpush1.msra.mxu0 0.0
        %1137 = vmatprep.subr.mxu0 0.0
        %1138 = vmatpush1.msra.mxu0 0.0
        %1139 = vmatprep.subr.mxu0 0.0
        %1140 = vmatpush1.msra.mxu0 0.0
        %1141 = vmatprep.subr.mxu0 0.0
        %1142 = vmatpush1.msra.mxu0 0.0
        %1143 = vmatprep.subr.mxu0 0.0
        %1144 = vmatpush1.msra.mxu0 0.0
        %1145 = vmatprep.subr.mxu0 0.0
        %1146 = vmatpush1.msra.mxu0 0.0
        %1147 = vmatprep.subr.mxu0 0.0
        %1148 = vmatpush1.msra.mxu0 0.0
        %1149 = vmatprep.subr.mxu0 0.0
        %1150 = vmatpush1.msra.mxu0 0.0
        %1151 = vmatprep.subr.mxu0 0.0
        %1152 = vmatpush1.msra.mxu0 0.0
        %1153 = vmatprep.subr.mxu0 0.0
        %1154 = vmatpush1.msra.mxu0 0.0
        %1155 = vmatprep.mubr.f32.mxu0 0.0
        %1156 = vmatmul.mubr.f32.gmra.mrb[0].mxu0 %v748
        %v1157 = vpop.f32.mrb[0].mxu0
        %v1158 = vadd.f32 0.0, %v1157
        %v1159 = vpop.f32.mrb[0].mxu0
        %1160 = vmatprep.mubr.f32.mxu0 0.0
        %1161 = vmatmul.mubr.f32.gmra.mrb[0].mxu0 %v754
        %v1162 = vpop.f32.mrb[0].mxu0
        %v1163 = vadd.f32 0.0, %v1162
        %v1164 = vpop.f32.mrb[0].mxu0
        %1165 = vdwg.mxu0
        %v1166 = vld [vmem:[#allocation7] sm:$0xff]
        %v1167 = vld [vmem:[#allocation7 + $0x8] sm:$0xff]
        %v1168 = vld [vmem:[#allocation7 + $0x10] sm:$0xff]
        %v1169 = vld [vmem:[#allocation7 + $0x18] sm:$0xff]
        %v1170 = vld [vmem:[#allocation7 + $0x20] sm:$0xff]
        %v1171 = vld [vmem:[#allocation7 + $0x28] sm:$0xff]
        %v1172 = vld [vmem:[#allocation7 + $0x30] sm:$0xff]
        %v1173 = vld [vmem:[#allocation7 + $0x38] sm:$0xff]
        %v1174 = vld [vmem:[#allocation7 + $0x40] sm:$0xff]
        %v1175 = vld [vmem:[#allocation7 + $0x48] sm:$0xff]
        %v1176 = vld [vmem:[#allocation7 + $0x50] sm:$0xff]
        %v1177 = vld [vmem:[#allocation7 + $0x58] sm:$0xff]
        %v1178 = vld [vmem:[#allocation7 + $0x60] sm:$0xff]
        %v1179 = vld [vmem:[#allocation7 + $0x68] sm:$0xff]
        %v1180 = vld [vmem:[#allocation7 + $0x70] sm:$0xff]
        %v1181 = vld [vmem:[#allocation7 + $0x78] sm:$0xff]
        %v1182 = vld [vmem:[%s4] sm:$0x1]
        %v1184 = vlaneseq
        %v1185 = vshrl.u32 %v1184, 7
        %v1186 = vsub.s32 0, %v1185
        %v1187 = vrot.slane %v1182, %v1186
        %1189 = vmatprep.subr.mxu0 0.0
        %1190 = vmatpush1.msra.mxu0 %v1166
        %1191 = vmatprep.subr.mxu0 0.0
        %1192 = vmatpush1.msra.mxu0 %v1167
        %1193 = vmatprep.subr.mxu0 0.0
        %1194 = vmatpush1.msra.mxu0 %v1168
        %1195 = vmatprep.subr.mxu0 0.0
        %1196 = vmatpush1.msra.mxu0 %v1169
        %1197 = vmatprep.subr.mxu0 0.0
        %1198 = vmatpush1.msra.mxu0 %v1170
        %1199 = vmatprep.subr.mxu0 0.0
        %1200 = vmatpush1.msra.mxu0 %v1171
        %1201 = vmatprep.subr.mxu0 0.0
        %1202 = vmatpush1.msra.mxu0 %v1172
        %1203 = vmatprep.subr.mxu0 0.0
        %1204 = vmatpush1.msra.mxu0 %v1173
        %1205 = vmatprep.subr.mxu0 0.0
        %1206 = vmatpush1.msra.mxu0 %v1174
        %1207 = vmatprep.subr.mxu0 0.0
        %1208 = vmatpush1.msra.mxu0 %v1175
        %1209 = vmatprep.subr.mxu0 0.0
        %1210 = vmatpush1.msra.mxu0 %v1176
        %1211 = vmatprep.subr.mxu0 0.0
        %1212 = vmatpush1.msra.mxu0 %v1177
        %1213 = vmatprep.subr.mxu0 0.0
        %1214 = vmatpush1.msra.mxu0 %v1178
        %1215 = vmatprep.subr.mxu0 0.0
        %1216 = vmatpush1.msra.mxu0 %v1179
        %1217 = vmatprep.subr.mxu0 0.0
        %1218 = vmatpush1.msra.mxu0 %v1180
        %1219 = vmatprep.subr.mxu0 0.0
        %1220 = vmatpush1.msra.mxu0 %v1181
        %1221 = vmatprep.subr.mxu0 0.0
        %1222 = vmatpush1.msra.mxu0 0.0
        %1223 = vmatprep.subr.mxu0 0.0
        %1224 = vmatpush1.msra.mxu0 0.0
        %1225 = vmatprep.subr.mxu0 0.0
        %1226 = vmatpush1.msra.mxu0 0.0
        %1227 = vmatprep.subr.mxu0 0.0
        %1228 = vmatpush1.msra.mxu0 0.0
        %1229 = vmatprep.subr.mxu0 0.0
        %1230 = vmatpush1.msra.mxu0 0.0
        %1231 = vmatprep.subr.mxu0 0.0
        %1232 = vmatpush1.msra.mxu0 0.0
        %1233 = vmatprep.subr.mxu0 0.0
        %1234 = vmatpush1.msra.mxu0 0.0
        %1235 = vmatprep.subr.mxu0 0.0
        %1236 = vmatpush1.msra.mxu0 0.0
        %1237 = vmatprep.subr.mxu0 0.0
        %1238 = vmatpush1.msra.mxu0 0.0
        %1239 = vmatprep.subr.mxu0 0.0
        %1240 = vmatpush1.msra.mxu0 0.0
        %1241 = vmatprep.subr.mxu0 0.0
        %1242 = vmatpush1.msra.mxu0 0.0
        %1243 = vmatprep.subr.mxu0 0.0
        %1244 = vmatpush1.msra.mxu0 0.0
        %1245 = vmatprep.subr.mxu0 0.0
        %1246 = vmatpush1.msra.mxu0 0.0
        %1247 = vmatprep.subr.mxu0 0.0
        %1248 = vmatpush1.msra.mxu0 0.0
        %1249 = vmatprep.subr.mxu0 0.0
        %1250 = vmatpush1.msra.mxu0 0.0
        %1251 = vmatprep.subr.mxu0 0.0
        %1252 = vmatpush1.msra.mxu0 0.0
        %1253 = vmatprep.mubr.f32.mxu0 0.0
        %1254 = vmatmul.mubr.f32.gmra.mrb[0].mxu0 %v1158
        %v1255 = vpop.f32.mrb[0].mxu0
        %v1256 = vadd.f32 %v1187, %v1255
        %v1257 = vpop.f32.mrb[0].mxu0
        %1258 = vmatprep.mubr.f32.mxu0 0.0
        %1259 = vmatmul.mubr.f32.gmra.mrb[0].mxu0 %v1163
        %v1260 = vpop.f32.mrb[0].mxu0
        %v1261 = vadd.f32 %v1187, %v1260
        %v1262 = vpop.f32.mrb[0].mxu0
        %1263 = vdwg.mxu0
        %v1264 = vadd.f32 %v559, %v1256
        %v1265 = vadd.f32 %v560, %v1261
        %v1266 = vld [vmem:[%s11] sm:$0x1]
        %v1267 = vld [vmem:[%s12] sm:$0x1]
        %1268 = vadd.xlane.f32.xlu0 %v1264
        %v1269 = vpop.xlane.xlu0 %1268
        %1270 = vadd.xlane.f32.xlu0 %v1265
        %v1271 = vpop.xlane.xlu0 %1270
        %v1272 = vmul.f32 %v1269, %v567
        %v1273 = vmul.f32 %v1271, %v567
        %v1274 = vsub.f32 %v1264, %v1272
        %v1275 = vsub.f32 %v1265, %v1273
        %v1276 = vmul.f32 %v1274, %v1274
        %v1277 = vmul.f32 %v1275, %v1275
        %1278 = vadd.xlane.f32.xlu0 %v1276
        %v1279 = vpop.xlane.xlu0 %1278
        %1280 = vadd.xlane.f32.xlu0 %v1277
        %v1281 = vpop.xlane.xlu0 %1280
        %v1282 = vmul.f32 %v1279, 0.007874016
        %v1283 = vmul.f32 %v1281, 0.007874016
        %v1284 = vrsqrt.pop %v1282
        %v1285 = vmul.f32 %v1282, %v1284
        %vm1286 = vcmp.eq.f32.partialorder %v1282, inf
        %v1287 = vsel %vm1286, %v1282, %v1285
        %vm1288 = vcmp.eq.f32.partialorder %v1282, 0.0
        %v1289 = vand.u32 %v1282, 2147483648
        %v1290 = vsel %vm1288, %v1289, %v1287
        %v1291 = vrsqrt.pop %v1283
        %v1292 = vmul.f32 %v1283, %v1291
        %vm1293 = vcmp.eq.f32.partialorder %v1283, inf
        %v1294 = vsel %vm1293, %v1283, %v1292
        %vm1295 = vcmp.eq.f32.partialorder %v1283, 0.0
        %v1296 = vand.u32 %v1283, 2147483648
        %v1297 = vsel %vm1295, %v1296, %v1294
        %v1298 = vadd.f32 %v1290, 1e-06
        %v1299 = vadd.f32 %v1297, 1e-06
        %v1300 = vrcp.pop %v1298
        %v1301 = vrcp.pop %v1299
        %v1302 = vmul.f32 %v1274, %v1300
        %v1303 = vmul.f32 %v1275, %v1301
        %v1305 = vlaneseq
        %v1306 = vshrl.u32 %v1305, 7
        %v1307 = vsub.s32 0, %v1306
        %v1308 = vrot.slane %v1266, %v1307
        %v1310 = vmul.f32 %v1308, %v1302
        %v1311 = vmul.f32 %v1308, %v1303
        %v1313 = vlaneseq
        %v1314 = vshrl.u32 %v1313, 7
        %v1315 = vsub.s32 0, %v1314
        %v1316 = vrot.slane %v1267, %v1315
        %v1318 = vadd.f32 %v1310, %v1316
        %v1319 = vadd.f32 %v1311, %v1316
        %v1320 = vld [vmem:[#allocation8] sm:$0xff]
        %v1321 = vld [vmem:[#allocation8 + $0x8] sm:$0xff]
        %v1322 = vld [vmem:[#allocation8 + $0x10] sm:$0xff]
        %v1323 = vld [vmem:[#allocation8 + $0x18] sm:$0xff]
        %v1324 = vld [vmem:[#allocation8 + $0x20] sm:$0xff]
        %v1325 = vld [vmem:[#allocation8 + $0x28] sm:$0xff]
        %v1326 = vld [vmem:[#allocation8 + $0x30] sm:$0xff]
        %v1327 = vld [vmem:[#allocation8 + $0x38] sm:$0xff]
        %v1328 = vld [vmem:[#allocation8 + $0x40] sm:$0xff]
        %v1329 = vld [vmem:[#allocation8 + $0x48] sm:$0xff]
        %v1330 = vld [vmem:[#allocation8 + $0x50] sm:$0xff]
        %v1331 = vld [vmem:[#allocation8 + $0x58] sm:$0xff]
        %v1332 = vld [vmem:[#allocation8 + $0x60] sm:$0xff]
        %v1333 = vld [vmem:[#allocation8 + $0x68] sm:$0xff]
        %v1334 = vld [vmem:[#allocation8 + $0x70] sm:$0xff]
        %v1335 = vld [vmem:[#allocation8 + $0x78] sm:$0xff]
        %v1336 = vld [vmem:[#allocation8 + $0x80] sm:$0xff]
        %v1337 = vld [vmem:[#allocation8 + $0x88] sm:$0xff]
        %v1338 = vld [vmem:[#allocation8 + $0x90] sm:$0xff]
        %v1339 = vld [vmem:[#allocation8 + $0x98] sm:$0xff]
        %v1340 = vld [vmem:[#allocation8 + $0xa0] sm:$0xff]
        %v1341 = vld [vmem:[#allocation8 + $0xa8] sm:$0xff]
        %v1342 = vld [vmem:[#allocation8 + $0xb0] sm:$0xff]
        %v1343 = vld [vmem:[#allocation8 + $0xb8] sm:$0xff]
        %v1344 = vld [vmem:[#allocation8 + $0xc0] sm:$0xff]
        %v1345 = vld [vmem:[#allocation8 + $0xc8] sm:$0xff]
        %v1346 = vld [vmem:[#allocation8 + $0xd0] sm:$0xff]
        %v1347 = vld [vmem:[#allocation8 + $0xd8] sm:$0xff]
        %v1348 = vld [vmem:[#allocation8 + $0xe0] sm:$0xff]
        %v1349 = vld [vmem:[#allocation8 + $0xe8] sm:$0xff]
        %v1350 = vld [vmem:[#allocation8 + $0xf0] sm:$0xff]
        %v1351 = vld [vmem:[#allocation8 + $0xf8] sm:$0xff]
        %v1352 = vld [vmem:[#allocation8 + $0x100] sm:$0xff]
        %v1353 = vld [vmem:[#allocation8 + $0x108] sm:$0xff]
        %v1354 = vld [vmem:[#allocation8 + $0x110] sm:$0xff]
        %v1355 = vld [vmem:[#allocation8 + $0x118] sm:$0xff]
        %v1356 = vld [vmem:[#allocation8 + $0x120] sm:$0xff]
        %v1357 = vld [vmem:[#allocation8 + $0x128] sm:$0xff]
        %v1358 = vld [vmem:[#allocation8 + $0x130] sm:$0xff]
        %v1359 = vld [vmem:[#allocation8 + $0x138] sm:$0xff]
        %v1360 = vld [vmem:[#allocation8 + $0x140] sm:$0xff]
        %v1361 = vld [vmem:[#allocation8 + $0x148] sm:$0xff]
        %v1362 = vld [vmem:[#allocation8 + $0x150] sm:$0xff]
        %v1363 = vld [vmem:[#allocation8 + $0x158] sm:$0xff]
        %v1364 = vld [vmem:[#allocation8 + $0x160] sm:$0xff]
        %v1365 = vld [vmem:[#allocation8 + $0x168] sm:$0xff]
        %v1366 = vld [vmem:[#allocation8 + $0x170] sm:$0xff]
        %v1367 = vld [vmem:[#allocation8 + $0x178] sm:$0xff]
        %v1368 = vld [vmem:[#allocation8 + $0x180] sm:$0xff]
        %v1369 = vld [vmem:[#allocation8 + $0x188] sm:$0xff]
        %v1370 = vld [vmem:[#allocation8 + $0x190] sm:$0xff]
        %v1371 = vld [vmem:[#allocation8 + $0x198] sm:$0xff]
        %v1372 = vld [vmem:[#allocation8 + $0x1a0] sm:$0xff]
        %v1373 = vld [vmem:[#allocation8 + $0x1a8] sm:$0xff]
        %v1374 = vld [vmem:[#allocation8 + $0x1b0] sm:$0xff]
        %v1375 = vld [vmem:[#allocation8 + $0x1b8] sm:$0xff]
        %v1376 = vld [vmem:[#allocation8 + $0x1c0] sm:$0xff]
        %v1377 = vld [vmem:[#allocation8 + $0x1c8] sm:$0xff]
        %v1378 = vld [vmem:[#allocation8 + $0x1d0] sm:$0xff]
        %v1379 = vld [vmem:[#allocation8 + $0x1d8] sm:$0xff]
        %v1380 = vld [vmem:[#allocation8 + $0x1e0] sm:$0xff]
        %v1381 = vld [vmem:[#allocation8 + $0x1e8] sm:$0xff]
        %v1382 = vld [vmem:[#allocation8 + $0x1f0] sm:$0xff]
        %v1383 = vld [vmem:[#allocation8 + $0x1f8] sm:$0xff]
        %v1384 = vld [vmem:[%s6] sm:$0xf]
        %v1386 = vlaneseq
        %v1387 = vshrl.u32 %v1386, 7
        %v1388 = vsub.s32 0, %v1387
        %v1389 = vrot.slane %v1384, %v1388
        %v1390 = vlaneseq
        %v1391 = vshrl.u32 %v1390, 7
        %v1392 = vsub.s32 1, %v1391
        %v1393 = vrot.slane %v1384, %v1392
        %v1394 = vlaneseq
        %v1395 = vshrl.u32 %v1394, 7
        %v1396 = vsub.s32 2, %v1395
        %v1397 = vrot.slane %v1384, %v1396
        %v1398 = vlaneseq
        %v1399 = vshrl.u32 %v1398, 7
        %v1400 = vsub.s32 3, %v1399
        %v1401 = vrot.slane %v1384, %v1400
        %1406 = vmatprep.subr.mxu0 %v1321
        %1407 = vmatpush1.msra.mxu0 %v1320
        %1408 = vmatprep.subr.mxu0 %v1325
        %1409 = vmatpush1.msra.mxu0 %v1324
        %1410 = vmatprep.subr.mxu0 %v1329
        %1411 = vmatpush1.msra.mxu0 %v1328
        %1412 = vmatprep.subr.mxu0 %v1333
        %1413 = vmatpush1.msra.mxu0 %v1332
        %1414 = vmatprep.subr.mxu0 %v1337
        %1415 = vmatpush1.msra.mxu0 %v1336
        %1416 = vmatprep.subr.mxu0 %v1341
        %1417 = vmatpush1.msra.mxu0 %v1340
        %1418 = vmatprep.subr.mxu0 %v1345
        %1419 = vmatpush1.msra.mxu0 %v1344
        %1420 = vmatprep.subr.mxu0 %v1349
        %1421 = vmatpush1.msra.mxu0 %v1348
        %1422 = vmatprep.subr.mxu0 %v1353
        %1423 = vmatpush1.msra.mxu0 %v1352
        %1424 = vmatprep.subr.mxu0 %v1357
        %1425 = vmatpush1.msra.mxu0 %v1356
        %1426 = vmatprep.subr.mxu0 %v1361
        %1427 = vmatpush1.msra.mxu0 %v1360
        %1428 = vmatprep.subr.mxu0 %v1365
        %1429 = vmatpush1.msra.mxu0 %v1364
        %1430 = vmatprep.subr.mxu0 %v1369
        %1431 = vmatpush1.msra.mxu0 %v1368
        %1432 = vmatprep.subr.mxu0 %v1373
        %1433 = vmatpush1.msra.mxu0 %v1372
        %1434 = vmatprep.subr.mxu0 %v1377
        %1435 = vmatpush1.msra.mxu0 %v1376
        %1436 = vmatprep.subr.mxu0 %v1381
        %1437 = vmatpush1.msra.mxu0 %v1380
        %1438 = vmatprep.subr.mxu0 0.0
        %1439 = vmatpush1.msra.mxu0 0.0
        %1440 = vmatprep.subr.mxu0 0.0
        %1441 = vmatpush1.msra.mxu0 0.0
        %1442 = vmatprep.subr.mxu0 0.0
        %1443 = vmatpush1.msra.mxu0 0.0
        %1444 = vmatprep.subr.mxu0 0.0
        %1445 = vmatpush1.msra.mxu0 0.0
        %1446 = vmatprep.subr.mxu0 0.0
        %1447 = vmatpush1.msra.mxu0 0.0
        %1448 = vmatprep.subr.mxu0 0.0
        %1449 = vmatpush1.msra.mxu0 0.0
        %1450 = vmatprep.subr.mxu0 0.0
        %1451 = vmatpush1.msra.mxu0 0.0
        %1452 = vmatprep.subr.mxu0 0.0
        %1453 = vmatpush1.msra.mxu0 0.0
        %1454 = vmatprep.subr.mxu0 0.0
        %1455 = vmatpush1.msra.mxu0 0.0
        %1456 = vmatprep.subr.mxu0 0.0
        %1457 = vmatpush1.msra.mxu0 0.0
        %1458 = vmatprep.subr.mxu0 0.0
        %1459 = vmatpush1.msra.mxu0 0.0
        %1460 = vmatprep.subr.mxu0 0.0
        %1461 = vmatpush1.msra.mxu0 0.0
        %1462 = vmatprep.subr.mxu0 0.0
        %1463 = vmatpush1.msra.mxu0 0.0
        %1464 = vmatprep.subr.mxu0 0.0
        %1465 = vmatpush1.msra.mxu0 0.0
        %1466 = vmatprep.subr.mxu0 0.0
        %1467 = vmatpush1.msra.mxu0 0.0
        %1468 = vmatprep.subr.mxu0 0.0
        %1469 = vmatpush1.msra.mxu0 0.0
        %1470 = vmatprep.mubr.f32.mxu0 0.0
        %1471 = vmatmul.mubr.f32.gmra.mrb[0].mxu0 %v1318
        %v1472 = vpop.f32.mrb[0].mxu0
        %v1473 = vadd.f32 %v1389, %v1472
        %v1474 = vpop.f32.mrb[0].mxu0
        %v1475 = vadd.f32 %v1393, %v1474
        %1476 = vmatprep.mubr.f32.mxu0 0.0
        %1477 = vmatmul.mubr.f32.gmra.mrb[0].mxu0 %v1319
        %v1478 = vpop.f32.mrb[0].mxu0
        %v1479 = vadd.f32 %v1389, %v1478
        %v1480 = vpop.f32.mrb[0].mxu0
        %v1481 = vadd.f32 %v1393, %v1480
        %1482 = vdwg.mxu0
        %1483 = vmatprep.subr.mxu0 %v1323
        %1484 = vmatpush1.msra.mxu0 %v1322
        %1485 = vmatprep.subr.mxu0 %v1327
        %1486 = vmatpush1.msra.mxu0 %v1326
        %1487 = vmatprep.subr.mxu0 %v1331
        %1488 = vmatpush1.msra.mxu0 %v1330
        %1489 = vmatprep.subr.mxu0 %v1335
        %1490 = vmatpush1.msra.mxu0 %v1334
        %1491 = vmatprep.subr.mxu0 %v1339
        %1492 = vmatpush1.msra.mxu0 %v1338
        %1493 = vmatprep.subr.mxu0 %v1343
        %1494 = vmatpush1.msra.mxu0 %v1342
        %1495 = vmatprep.subr.mxu0 %v1347
        %1496 = vmatpush1.msra.mxu0 %v1346
        %1497 = vmatprep.subr.mxu0 %v1351
        %1498 = vmatpush1.msra.mxu0 %v1350
        %1499 = vmatprep.subr.mxu0 %v1355
        %1500 = vmatpush1.msra.mxu0 %v1354
        %1501 = vmatprep.subr.mxu0 %v1359
        %1502 = vmatpush1.msra.mxu0 %v1358
        %1503 = vmatprep.subr.mxu0 %v1363
        %1504 = vmatpush1.msra.mxu0 %v1362
        %1505 = vmatprep.subr.mxu0 %v1367
        %1506 = vmatpush1.msra.mxu0 %v1366
        %1507 = vmatprep.subr.mxu0 %v1371
        %1508 = vmatpush1.msra.mxu0 %v1370
        %1509 = vmatprep.subr.mxu0 %v1375
        %1510 = vmatpush1.msra.mxu0 %v1374
        %1511 = vmatprep.subr.mxu0 %v1379
        %1512 = vmatpush1.msra.mxu0 %v1378
        %1513 = vmatprep.subr.mxu0 %v1383
        %1514 = vmatpush1.msra.mxu0 %v1382
        %1515 = vmatprep.subr.mxu0 0.0
        %1516 = vmatpush1.msra.mxu0 0.0
        %1517 = vmatprep.subr.mxu0 0.0
        %1518 = vmatpush1.msra.mxu0 0.0
        %1519 = vmatprep.subr.mxu0 0.0
        %1520 = vmatpush1.msra.mxu0 0.0
        %1521 = vmatprep.subr.mxu0 0.0
        %1522 = vmatpush1.msra.mxu0 0.0
        %1523 = vmatprep.subr.mxu0 0.0
        %1524 = vmatpush1.msra.mxu0 0.0
        %1525 = vmatprep.subr.mxu0 0.0
        %1526 = vmatpush1.msra.mxu0 0.0
        %1527 = vmatprep.subr.mxu0 0.0
        %1528 = vmatpush1.msra.mxu0 0.0
        %1529 = vmatprep.subr.mxu0 0.0
        %1530 = vmatpush1.msra.mxu0 0.0
        %1531 = vmatprep.subr.mxu0 0.0
        %1532 = vmatpush1.msra.mxu0 0.0
        %1533 = vmatprep.subr.mxu0 0.0
        %1534 = vmatpush1.msra.mxu0 0.0
        %1535 = vmatprep.subr.mxu0 0.0
        %1536 = vmatpush1.msra.mxu0 0.0
        %1537 = vmatprep.subr.mxu0 0.0
        %1538 = vmatpush1.msra.mxu0 0.0
        %1539 = vmatprep.subr.mxu0 0.0
        %1540 = vmatpush1.msra.mxu0 0.0
        %1541 = vmatprep.subr.mxu0 0.0
        %1542 = vmatpush1.msra.mxu0 0.0
        %1543 = vmatprep.subr.mxu0 0.0
        %1544 = vmatpush1.msra.mxu0 0.0
        %1545 = vmatprep.subr.mxu0 0.0
        %1546 = vmatpush1.msra.mxu0 0.0
        %1547 = vmatprep.mubr.f32.mxu0 0.0
        %1548 = vmatmul.mubr.f32.gmra.mrb[0].mxu0 %v1318
        %v1549 = vpop.f32.mrb[0].mxu0
        %v1550 = vadd.f32 %v1397, %v1549
        %v1551 = vpop.f32.mrb[0].mxu0
        %v1552 = vadd.f32 %v1401, %v1551
        %1553 = vmatprep.mubr.f32.mxu0 0.0
        %1554 = vmatmul.mubr.f32.gmra.mrb[0].mxu0 %v1319
        %v1555 = vpop.f32.mrb[0].mxu0
        %v1556 = vadd.f32 %v1397, %v1555
        %v1557 = vpop.f32.mrb[0].mxu0
        %v1558 = vadd.f32 %v1401, %v1557
        %1559 = vdwg.mxu0
        %v1560 = vmax.f32 %v1473, 0.0
        %v1561 = vmax.f32 %v1475, 0.0
        %v1562 = vmax.f32 %v1550, 0.0
        %v1563 = vmax.f32 %v1552, 0.0
        %v1564 = vmax.f32 %v1479, 0.0
        %v1565 = vmax.f32 %v1481, 0.0
        %v1566 = vmax.f32 %v1556, 0.0
        %v1567 = vmax.f32 %v1558, 0.0
        %v1568 = vld [vmem:[#allocation10] sm:$0xff]
        %v1569 = vld [vmem:[#allocation10 + $0x8] sm:$0xff]
        %v1570 = vld [vmem:[#allocation10 + $0x10] sm:$0xff]
        %v1571 = vld [vmem:[#allocation10 + $0x18] sm:$0xff]
        %v1572 = vld [vmem:[#allocation10 + $0x20] sm:$0xff]
        %v1573 = vld [vmem:[#allocation10 + $0x28] sm:$0xff]
        %v1574 = vld [vmem:[#allocation10 + $0x30] sm:$0xff]
        %v1575 = vld [vmem:[#allocation10 + $0x38] sm:$0xff]
        %v1576 = vld [vmem:[#allocation10 + $0x40] sm:$0xff]
        %v1577 = vld [vmem:[#allocation10 + $0x48] sm:$0xff]
        %v1578 = vld [vmem:[#allocation10 + $0x50] sm:$0xff]
        %v1579 = vld [vmem:[#allocation10 + $0x58] sm:$0xff]
        %v1580 = vld [vmem:[#allocation10 + $0x60] sm:$0xff]
        %v1581 = vld [vmem:[#allocation10 + $0x68] sm:$0xff]
        %v1582 = vld [vmem:[#allocation10 + $0x70] sm:$0xff]
        %v1583 = vld [vmem:[#allocation10 + $0x78] sm:$0xff]
        %v1584 = vld [vmem:[#allocation10 + $0x80] sm:$0xff]
        %v1585 = vld [vmem:[#allocation10 + $0x88] sm:$0xff]
        %v1586 = vld [vmem:[#allocation10 + $0x90] sm:$0xff]
        %v1587 = vld [vmem:[#allocation10 + $0x98] sm:$0xff]
        %v1588 = vld [vmem:[#allocation10 + $0xa0] sm:$0xff]
        %v1589 = vld [vmem:[#allocation10 + $0xa8] sm:$0xff]
        %v1590 = vld [vmem:[#allocation10 + $0xb0] sm:$0xff]
        %v1591 = vld [vmem:[#allocation10 + $0xb8] sm:$0xff]
        %v1592 = vld [vmem:[#allocation10 + $0xc0] sm:$0xff]
        %v1593 = vld [vmem:[#allocation10 + $0xc8] sm:$0xff]
        %v1594 = vld [vmem:[#allocation10 + $0xd0] sm:$0xff]
        %v1595 = vld [vmem:[#allocation10 + $0xd8] sm:$0xff]
        %v1596 = vld [vmem:[#allocation10 + $0xe0] sm:$0xff]
        %v1597 = vld [vmem:[#allocation10 + $0xe8] sm:$0xff]
        %v1598 = vld [vmem:[#allocation10 + $0xf0] sm:$0xff]
        %v1599 = vld [vmem:[#allocation10 + $0xf8] sm:$0xff]
        %v1600 = vld [vmem:[#allocation10 + $0x100] sm:$0xff]
        %v1601 = vld [vmem:[#allocation10 + $0x108] sm:$0xff]
        %v1602 = vld [vmem:[#allocation10 + $0x110] sm:$0xff]
        %v1603 = vld [vmem:[#allocation10 + $0x118] sm:$0xff]
        %v1604 = vld [vmem:[#allocation10 + $0x120] sm:$0xff]
        %v1605 = vld [vmem:[#allocation10 + $0x128] sm:$0xff]
        %v1606 = vld [vmem:[#allocation10 + $0x130] sm:$0xff]
        %v1607 = vld [vmem:[#allocation10 + $0x138] sm:$0xff]
        %v1608 = vld [vmem:[#allocation10 + $0x140] sm:$0xff]
        %v1609 = vld [vmem:[#allocation10 + $0x148] sm:$0xff]
        %v1610 = vld [vmem:[#allocation10 + $0x150] sm:$0xff]
        %v1611 = vld [vmem:[#allocation10 + $0x158] sm:$0xff]
        %v1612 = vld [vmem:[#allocation10 + $0x160] sm:$0xff]
        %v1613 = vld [vmem:[#allocation10 + $0x168] sm:$0xff]
        %v1614 = vld [vmem:[#allocation10 + $0x170] sm:$0xff]
        %v1615 = vld [vmem:[#allocation10 + $0x178] sm:$0xff]
        %v1616 = vld [vmem:[#allocation10 + $0x180] sm:$0xff]
        %v1617 = vld [vmem:[#allocation10 + $0x188] sm:$0xff]
        %v1618 = vld [vmem:[#allocation10 + $0x190] sm:$0xff]
        %v1619 = vld [vmem:[#allocation10 + $0x198] sm:$0xff]
        %v1620 = vld [vmem:[#allocation10 + $0x1a0] sm:$0xff]
        %v1621 = vld [vmem:[#allocation10 + $0x1a8] sm:$0xff]
        %v1622 = vld [vmem:[#allocation10 + $0x1b0] sm:$0xff]
        %v1623 = vld [vmem:[#allocation10 + $0x1b8] sm:$0xff]
        %v1624 = vld [vmem:[#allocation10 + $0x1c0] sm:$0xff]
        %v1625 = vld [vmem:[#allocation10 + $0x1c8] sm:$0xff]
        %v1626 = vld [vmem:[#allocation10 + $0x1d0] sm:$0xff]
        %v1627 = vld [vmem:[#allocation10 + $0x1d8] sm:$0xff]
        %v1628 = vld [vmem:[#allocation10 + $0x1e0] sm:$0xff]
        %v1629 = vld [vmem:[#allocation10 + $0x1e8] sm:$0xff]
        %v1630 = vld [vmem:[#allocation10 + $0x1f0] sm:$0xff]
        %v1631 = vld [vmem:[#allocation10 + $0x1f8] sm:$0xff]
        %v1632 = vld [vmem:[%s8] sm:$0x1]
        %v1634 = vlaneseq
        %v1635 = vshrl.u32 %v1634, 7
        %v1636 = vsub.s32 0, %v1635
        %v1637 = vrot.slane %v1632, %v1636
        %1639 = vmatprep.subr.mxu0 0.0
        %1640 = vmatpush1.msra.mxu0 %v1568
        %1641 = vmatprep.subr.mxu0 0.0
        %1642 = vmatpush1.msra.mxu0 %v1569
        %1643 = vmatprep.subr.mxu0 0.0
        %1644 = vmatpush1.msra.mxu0 %v1570
        %1645 = vmatprep.subr.mxu0 0.0
        %1646 = vmatpush1.msra.mxu0 %v1571
        %1647 = vmatprep.subr.mxu0 0.0
        %1648 = vmatpush1.msra.mxu0 %v1572
        %1649 = vmatprep.subr.mxu0 0.0
        %1650 = vmatpush1.msra.mxu0 %v1573
        %1651 = vmatprep.subr.mxu0 0.0
        %1652 = vmatpush1.msra.mxu0 %v1574
        %1653 = vmatprep.subr.mxu0 0.0
        %1654 = vmatpush1.msra.mxu0 %v1575
        %1655 = vmatprep.subr.mxu0 0.0
        %1656 = vmatpush1.msra.mxu0 %v1576
        %1657 = vmatprep.subr.mxu0 0.0
        %1658 = vmatpush1.msra.mxu0 %v1577
        %1659 = vmatprep.subr.mxu0 0.0
        %1660 = vmatpush1.msra.mxu0 %v1578
        %1661 = vmatprep.subr.mxu0 0.0
        %1662 = vmatpush1.msra.mxu0 %v1579
        %1663 = vmatprep.subr.mxu0 0.0
        %1664 = vmatpush1.msra.mxu0 %v1580
        %1665 = vmatprep.subr.mxu0 0.0
        %1666 = vmatpush1.msra.mxu0 %v1581
        %1667 = vmatprep.subr.mxu0 0.0
        %1668 = vmatpush1.msra.mxu0 %v1582
        %1669 = vmatprep.subr.mxu0 0.0
        %1670 = vmatpush1.msra.mxu0 %v1583
        %1671 = vmatprep.subr.mxu0 0.0
        %1672 = vmatpush1.msra.mxu0 %v1584
        %1673 = vmatprep.subr.mxu0 0.0
        %1674 = vmatpush1.msra.mxu0 %v1585
        %1675 = vmatprep.subr.mxu0 0.0
        %1676 = vmatpush1.msra.mxu0 %v1586
        %1677 = vmatprep.subr.mxu0 0.0
        %1678 = vmatpush1.msra.mxu0 %v1587
        %1679 = vmatprep.subr.mxu0 0.0
        %1680 = vmatpush1.msra.mxu0 %v1588
        %1681 = vmatprep.subr.mxu0 0.0
        %1682 = vmatpush1.msra.mxu0 %v1589
        %1683 = vmatprep.subr.mxu0 0.0
        %1684 = vmatpush1.msra.mxu0 %v1590
        %1685 = vmatprep.subr.mxu0 0.0
        %1686 = vmatpush1.msra.mxu0 %v1591
        %1687 = vmatprep.subr.mxu0 0.0
        %1688 = vmatpush1.msra.mxu0 %v1592
        %1689 = vmatprep.subr.mxu0 0.0
        %1690 = vmatpush1.msra.mxu0 %v1593
        %1691 = vmatprep.subr.mxu0 0.0
        %1692 = vmatpush1.msra.mxu0 %v1594
        %1693 = vmatprep.subr.mxu0 0.0
        %1694 = vmatpush1.msra.mxu0 %v1595
        %1695 = vmatprep.subr.mxu0 0.0
        %1696 = vmatpush1.msra.mxu0 %v1596
        %1697 = vmatprep.subr.mxu0 0.0
        %1698 = vmatpush1.msra.mxu0 %v1597
        %1699 = vmatprep.subr.mxu0 0.0
        %1700 = vmatpush1.msra.mxu0 %v1598
        %1701 = vmatprep.subr.mxu0 0.0
        %1702 = vmatpush1.msra.mxu0 %v1599
        %1703 = vmatprep.mubr.f32.mxu0 %v1561
        %1704 = vmatmul.mubr.f32.gmra.mrb[0].mxu0 %v1560
        %v1705 = vpop.f32.mrb[0].mxu0
        %v1706 = vadd.f32 %v1637, %v1705
        %v1707 = vpop.f32.mrb[0].mxu0
        %1708 = vmatprep.mubr.f32.mxu0 %v1565
        %1709 = vmatmul.mubr.f32.gmra.mrb[0].mxu0 %v1564
        %v1710 = vpop.f32.mrb[0].mxu0
        %v1711 = vadd.f32 %v1637, %v1710
        %v1712 = vpop.f32.mrb[0].mxu0
        %1713 = vdwg.mxu0
        %1714 = vmatprep.subr.mxu0 0.0
        %1715 = vmatpush1.msra.mxu0 %v1600
        %1716 = vmatprep.subr.mxu0 0.0
        %1717 = vmatpush1.msra.mxu0 %v1601
        %1718 = vmatprep.subr.mxu0 0.0
        %1719 = vmatpush1.msra.mxu0 %v1602
        %1720 = vmatprep.subr.mxu0 0.0
        %1721 = vmatpush1.msra.mxu0 %v1603
        %1722 = vmatprep.subr.mxu0 0.0
        %1723 = vmatpush1.msra.mxu0 %v1604
        %1724 = vmatprep.subr.mxu0 0.0
        %1725 = vmatpush1.msra.mxu0 %v1605
        %1726 = vmatprep.subr.mxu0 0.0
        %1727 = vmatpush1.msra.mxu0 %v1606
        %1728 = vmatprep.subr.mxu0 0.0
        %1729 = vmatpush1.msra.mxu0 %v1607
        %1730 = vmatprep.subr.mxu0 0.0
        %1731 = vmatpush1.msra.mxu0 %v1608
        %1732 = vmatprep.subr.mxu0 0.0
        %1733 = vmatpush1.msra.mxu0 %v1609
        %1734 = vmatprep.subr.mxu0 0.0
        %1735 = vmatpush1.msra.mxu0 %v1610
        %1736 = vmatprep.subr.mxu0 0.0
        %1737 = vmatpush1.msra.mxu0 %v1611
        %1738 = vmatprep.subr.mxu0 0.0
        %1739 = vmatpush1.msra.mxu0 %v1612
        %1740 = vmatprep.subr.mxu0 0.0
        %1741 = vmatpush1.msra.mxu0 %v1613
        %1742 = vmatprep.subr.mxu0 0.0
        %1743 = vmatpush1.msra.mxu0 %v1614
        %1744 = vmatprep.subr.mxu0 0.0
        %1745 = vmatpush1.msra.mxu0 %v1615
        %1746 = vmatprep.subr.mxu0 0.0
        %1747 = vmatpush1.msra.mxu0 %v1616
        %1748 = vmatprep.subr.mxu0 0.0
        %1749 = vmatpush1.msra.mxu0 %v1617
        %1750 = vmatprep.subr.mxu0 0.0
        %1751 = vmatpush1.msra.mxu0 %v1618
        %1752 = vmatprep.subr.mxu0 0.0
        %1753 = vmatpush1.msra.mxu0 %v1619
        %1754 = vmatprep.subr.mxu0 0.0
        %1755 = vmatpush1.msra.mxu0 %v1620
        %1756 = vmatprep.subr.mxu0 0.0
        %1757 = vmatpush1.msra.mxu0 %v1621
        %1758 = vmatprep.subr.mxu0 0.0
        %1759 = vmatpush1.msra.mxu0 %v1622
        %1760 = vmatprep.subr.mxu0 0.0
        %1761 = vmatpush1.msra.mxu0 %v1623
        %1762 = vmatprep.subr.mxu0 0.0
        %1763 = vmatpush1.msra.mxu0 %v1624
        %1764 = vmatprep.subr.mxu0 0.0
        %1765 = vmatpush1.msra.mxu0 %v1625
        %1766 = vmatprep.subr.mxu0 0.0
        %1767 = vmatpush1.msra.mxu0 %v1626
        %1768 = vmatprep.subr.mxu0 0.0
        %1769 = vmatpush1.msra.mxu0 %v1627
        %1770 = vmatprep.subr.mxu0 0.0
        %1771 = vmatpush1.msra.mxu0 %v1628
        %1772 = vmatprep.subr.mxu0 0.0
        %1773 = vmatpush1.msra.mxu0 %v1629
        %1774 = vmatprep.subr.mxu0 0.0
        %1775 = vmatpush1.msra.mxu0 %v1630
        %1776 = vmatprep.subr.mxu0 0.0
        %1777 = vmatpush1.msra.mxu0 %v1631
        %1778 = vmatprep.mubr.f32.mxu0 %v1563
        %1779 = vmatmul.mubr.f32.gmra.mrb[0].mxu0 %v1562
        %v1780 = vpop.f32.mrb[0].mxu0
        %v1781 = vadd.f32 %v1706, %v1780
        %v1782 = vpop.f32.mrb[0].mxu0
        %1783 = vmatprep.mubr.f32.mxu0 %v1567
        %1784 = vmatmul.mubr.f32.gmra.mrb[0].mxu0 %v1566
        %v1785 = vpop.f32.mrb[0].mxu0
        %v1786 = vadd.f32 %v1711, %v1785
        %v1787 = vpop.f32.mrb[0].mxu0
        %1788 = vdwg.mxu0
        %v1789 = vadd.f32 %v1264, %v1781
        %v1790 = vadd.f32 %v1265, %v1786
        %1791 = vst [vmem:[%s558] sm:$0xff] %v1789
        %1792 = vst [vmem:[%s558 + $0x8] sm:$0xff] %v1790
        %s1793 = sand.u32 %s341, 1
        %s1794 = scalar_lea.sflag [#allocation4], %s1793
        %s1795 = sand.u32 %s341, 1
        %s1796 = smul.addr %s1795, 16
        %s1797 = scalar_lea.vmem [#allocation13], %s1796
        // Predicated region
        $region101: #{tpu_custom_call.1} parent=75 // pred_check
          %p1798 = pneg %p351
        $region102: #{tpu_custom_call.1} parent=75 // pred_check_branch
          %1800 = sbr.rel (%p1798) target = $region104
        $region103: #{tpu_custom_call.1} parent=75 // pred_region
          %s1802 = ssub.s32 256, 256
          %1803 = vsyncadd %s1794, %s1802
          %s1804 = smul.addr %s34, 2
          %s1805 = smul.addr %s1804, 128
          %s1806 = scalar_lea.hbm %s14, %s1805
          %s1807 = sshll.u32 %s1797, 4
          %s1808 = int_to_ptr.vmem [resolvable:$true] %s1807
          %1813 = dma.vmem_to_hbm [thread:$0]  %s1808, 256, %s1806, %s1794, 128, 128, 8
        $region104: #{tpu_custom_call.1} parent=75 // pred_fallthru
          _
      $region76: #{tpu_custom_call.1} parent=5 // pred_fallthru
        _
      %p1814 = scmp.le.s32.totalorder 2, %s29
      // Predicated region
      $region105: #{tpu_custom_call.1} parent=5 // pred_check
        %p1815 = pneg %p1814
      $region106: #{tpu_custom_call.1} parent=5 // pred_check_branch
        %1817 = sbr.rel (%p1815) target = $region108
      $region107: #{tpu_custom_call.1} parent=5 // pred_region
        %s1818 = ssub.s32 %s29, 2
        // Predicated region
        $region109: #{tpu_custom_call.1} parent=107 // pred_check
          %p1819 = pneg %p357
        $region110: #{tpu_custom_call.1} parent=107 // pred_check_branch
          %1821 = sbr.rel (%p1819) target = $region112
        $region111: #{tpu_custom_call.1} parent=107 // pred_region
          %s1822 = sand.u32 %s342, 1
          %s1823 = scalar_lea.sflag [#allocation4], %s1822
          %s1824 = sand.u32 %s342, 1
          %s1825 = smul.addr %s1824, 16
          %s1826 = scalar_lea.vmem [#allocation13], %s1825
          %1827 = dma.done %s1823, 256
        $region112: #{tpu_custom_call.1} parent=107 // pred_fallthru
          _
      $region108: #{tpu_custom_call.1} parent=5 // pred_fallthru
        _
    $region6: #{tpu_custom_call.1} parent=1 // loop_footer
      %s33 = sadd.s32 1, %s29
    $region7: #{tpu_custom_call.1} parent=1 // loop_footer_branch
      %28 = sbr.rel target = $region3
    $region8: #{tpu_custom_call.1} parent=1 // loop_exit
      _
    %1828 = vsyncpa [#allocation3], 1
    %s1829 = scalar_lea.sflag [#allocation3], 1
    %1830 = vsyncpa %s1829, 1
    %1831 = vsyncpa [#allocation6], 1
    %1832 = vsyncpa [#allocation9], 1
    %1833 = vsyncpa [#allocation12], 1
    %1834 = vsyncpa [#allocation4], 1
    %s1835 = scalar_lea.sflag [#allocation4], 1
    %1836 = vsyncpa %s1835, 1

</llo_original>
